<compile_context>
chip_gen: v7x
topology: tpu7x:2x2x1
jax: 0.10.0
libtpu: 0.0.40
codegen_flags: <defaults>
</compile_context>

<pallas_src>
import math

import jax
import jax.numpy as jnp
from jax import lax
from jax.experimental import pallas as pl
from jax.experimental.pallas import tpu as pltpu

_EPS = 1e-5


# ---------------------------------------------------------------------------
# shared in-kernel math (f32)
# ---------------------------------------------------------------------------
def _layernorm_f32(x, w, b, eps=_EPS):
    mean = jnp.mean(x, axis=-1, keepdims=True)
    var = jnp.mean(jnp.square(x - mean), axis=-1, keepdims=True)
    return (x - mean) * lax.rsqrt(var + eps) * w + b


def _gelu_exact(x):
    # nn.GELU() default = exact erf GELU
    return 0.5 * x * (1.0 + lax.erf(x * (1.0 / math.sqrt(2.0))))


# ---------------------------------------------------------------------------
# pass 1: LN1 + Q/K/V projection, head-major bf16 outputs
# ---------------------------------------------------------------------------
def _make_qkv_kernel(n_head, head_dim, tile):
    H, Dh = n_head, head_dim

    def kernel(x_ref, aln_w_ref, aln_b_ref, wq_ref, bq_ref, wk_ref, wv_ref,
               bv_ref, q_ref, k_ref, v_ref):
        x = x_ref[0]                                               # (tile, D) f32
        y = _layernorm_f32(x, aln_w_ref[...], aln_b_ref[...]).astype(jnp.bfloat16)
        # 1/sqrt(Dh) is already folded into wq/bq by the wrapper.
        q = jnp.dot(y, wq_ref[...], preferred_element_type=jnp.float32) + bq_ref[...]
        k = jnp.dot(y, wk_ref[...], preferred_element_type=jnp.float32)   # no bias
        v = jnp.dot(y, wv_ref[...], preferred_element_type=jnp.float32) + bv_ref[...]
        # one transpose per projection tile (NOT per kv step): head-major (H,tile,Dh)
        q_ref[0] = jnp.transpose(q.reshape(tile, H, Dh), (1, 0, 2)).astype(jnp.bfloat16)
        k_ref[0] = jnp.transpose(k.reshape(tile, H, Dh), (1, 0, 2)).astype(jnp.bfloat16)
        v_ref[0] = jnp.transpose(v.reshape(tile, H, Dh), (1, 0, 2)).astype(jnp.bfloat16)

    return kernel


# ---------------------------------------------------------------------------
# pass 2: flash attention (online softmax) + out projection + residual
# ---------------------------------------------------------------------------
def _make_attn_kernel(n_head, head_dim, tq, tk):
    H, Dh = n_head, head_dim

    def kernel(x_ref, q_ref, k_ref, v_ref, wo_ref, bo_ref, o_ref,
               m_scr, l_scr, acc_scr):
        ki = pl.program_id(2)
        nk = pl.num_programs(2)

        @pl.when(ki == 0)
        def _():
            m_scr[...] = jnp.full(m_scr.shape, -jnp.inf, dtype=jnp.float32)
            l_scr[...] = jnp.zeros(l_scr.shape, dtype=jnp.float32)
            acc_scr[...] = jnp.zeros(acc_scr.shape, dtype=jnp.float32)

        # head-major bf16 tiles, already scaled -> no per-step relayout / scale mul
        q = q_ref[0]                                               # (H, tq, Dh)
        kt = k_ref[0]                                              # (H, tk, Dh)
        vt = v_ref[0]                                              # (H, tk, Dh)
        s = jnp.einsum("hqd,hkd->hqk", q, kt,
                       preferred_element_type=jnp.float32)         # (H, tq, tk)

        m_prev = m_scr[...]                                        # (H, tq, 1)
        m_new = jnp.maximum(m_prev, jnp.max(s, axis=-1, keepdims=True))
        alpha = jnp.exp(m_prev - m_new)
        p = jnp.exp(s - m_new)          # f32 exp (portable to v5e EUP)
        l_scr[...] = alpha * l_scr[...] + jnp.sum(p, axis=-1, keepdims=True)
        acc_scr[...] = alpha * acc_scr[...] + jnp.einsum(
            "hqk,hkd->hqd", p.astype(jnp.bfloat16), vt,
            preferred_element_type=jnp.float32)                    # (H, tq, Dh)
        m_scr[...] = m_new

        @pl.when(ki == nk - 1)
        def _():
            inv_l = pl.reciprocal(l_scr[...], approx=True)         # EUP path
            heads = acc_scr[...] * inv_l                           # (H, tq, Dh)
            wv_cat = jnp.transpose(heads, (1, 0, 2)).reshape(tq, H * Dh)
            attn = jnp.dot(wv_cat.astype(jnp.bfloat16), wo_ref[...],
                           preferred_element_type=jnp.float32) + bo_ref[...]
            o_ref[0] = (x_ref[0] + attn).astype(o_ref.dtype)

    return kernel


# ---------------------------------------------------------------------------
# pass 3: LN2 + MLP + residual
# ---------------------------------------------------------------------------
def _make_mlp_kernel(tile):
    del tile  # shape comes from the refs

    def kernel(x_ref, mln_w_ref, mln_b_ref, w1_ref, b1_ref, w2_ref, b2_ref,
               o_ref):
        x = x_ref[0]                                               # (tile, D) f32
        y = _layernorm_f32(x, mln_w_ref[...], mln_b_ref[...]).astype(jnp.bfloat16)
        h = jnp.dot(y, w1_ref[...], preferred_element_type=jnp.float32) + b1_ref[...]
        h = _gelu_exact(h)
        h2 = jnp.dot(h.astype(jnp.bfloat16), w2_ref[...],
                     preferred_element_type=jnp.float32) + b2_ref[...]
        o_ref[0] = (x + h2).astype(o_ref.dtype)

    return kernel


# ---------------------------------------------------------------------------
# wrapper helpers
# ---------------------------------------------------------------------------
def _const_spec(shape):
    """Constant-index weight block; single-buffered when supported."""
    zeros = (0,) * len(shape)

    def index_map(*_):
        return zeros

    try:
        return pl.BlockSpec(shape, index_map, pipeline_mode=pl.Buffered(1))
    except Exception:  # older Pallas without pipeline_mode / Buffered
        return pl.BlockSpec(shape, index_map)


def _vmem_limit_bytes():
    """Per-generation VMEM limit with headroom (e.g. ~56 MiB on v7x, 112 MiB on v6e)."""
    try:
        cap = int(pltpu.get_tpu_info().vmem_capacity_bytes)
    except Exception:
        return 64 * 1024 * 1024
    return max(32 * 1024 * 1024, min(cap - 8 * 1024 * 1024, 112 * 1024 * 1024))


# ---------------------------------------------------------------------------
# Wrapper
# ---------------------------------------------------------------------------
def residual_attention_block(x, params, n_head, *, tq=None, tk=None,
                             tproj=None, tmlp=None):
    """x: (B, T, D) f32.  params: dict of pre-transposed (in, out) f32 weights."""
    B, T, D = x.shape
    assert D % n_head == 0
    Dh = D // n_head
    # defaults: 128 (matches v5e MXU); sweep 256 on v6e/v7x via the kwargs
    tq = min(T, 128) if tq is None else tq
    tk = min(T, 128) if tk is None else tk
    tproj = tq if tproj is None else tproj
    tmlp = tq if tmlp is None else tmlp
    assert T % tq == 0 and T % tk == 0 and T % tproj == 0 and T % tmlp == 0
    nq, nk, nproj, nmlp = T // tq, T // tk, T // tproj, T // tmlp

    vmem_limit = _vmem_limit_bytes()
    bf = lambda a: a.astype(jnp.bfloat16)

    # fold 1/sqrt(Dh) into the Q projection (exact; constant weight scale is free)
    scale = 1.0 / math.sqrt(Dh)
    wq_s = bf(params["wq"] * scale)
    bq_s = params["bq"] * scale

    # ---------------- pass 1: LN1 + QKV (once per row tile) ----------------
    qkv_weights = [params["aln_w"], params["aln_b"],
                   wq_s, bq_s, bf(params["wk"]), bf(params["wv"]), params["bv"]]
    q, k, v = pl.pallas_call(
        _make_qkv_kernel(n_head, Dh, tproj),
        out_shape=tuple(jax.ShapeDtypeStruct((B, n_head, T, Dh), jnp.bfloat16)
                        for _ in range(3)),
        grid_spec=pltpu.PrefetchScalarGridSpec(
            num_scalar_prefetch=0,
            grid=(B, nproj),
            in_specs=[pl.BlockSpec((1, tproj, D), lambda b, t: (b, t, 0))]
                     + [_const_spec(w.shape) for w in qkv_weights],
            out_specs=tuple(pl.BlockSpec((1, n_head, tproj, Dh),
                                         lambda b, t: (b, 0, t, 0))
                            for _ in range(3)),
        ),
        compiler_params=pltpu.CompilerParams(
            dimension_semantics=("parallel", "parallel"),
            vmem_limit_bytes=vmem_limit),
    )(x, *qkv_weights)

    # ---------------- pass 2: flash attention + out-proj + residual --------
    attn_weights = [bf(params["wo"]), params["bo"]]
    x1 = pl.pallas_call(
        _make_attn_kernel(n_head, Dh, tq, tk),
        out_shape=jax.ShapeDtypeStruct((B, T, D), jnp.float32),
        grid_spec=pltpu.PrefetchScalarGridSpec(
            num_scalar_prefetch=0,
            grid=(B, nq, nk),
            in_specs=[pl.BlockSpec((1, tq, D), lambda b, qi, ki: (b, qi, 0)),
                      pl.BlockSpec((1, n_head, tq, Dh),
                                   lambda b, qi, ki: (b, 0, qi, 0)),
                      pl.BlockSpec((1, n_head, tk, Dh),
                                   lambda b, qi, ki: (b, 0, ki, 0)),
                      pl.BlockSpec((1, n_head, tk, Dh),
                                   lambda b, qi, ki: (b, 0, ki, 0))]
                     + [_const_spec(w.shape) for w in attn_weights],
            out_specs=pl.BlockSpec((1, tq, D), lambda b, qi, ki: (b, qi, 0)),
            scratch_shapes=[
                pltpu.VMEM((n_head, tq, 1), jnp.float32),   # running max
                pltpu.VMEM((n_head, tq, 1), jnp.float32),   # running sum
                pltpu.VMEM((n_head, tq, Dh), jnp.float32),  # output accumulator
            ],
        ),
        compiler_params=pltpu.CompilerParams(
            dimension_semantics=("parallel", "parallel", "arbitrary"),
            vmem_limit_bytes=vmem_limit),
    )(x, q, k, v, *attn_weights)

    # ---------------- pass 3: LN2 + MLP + residual --------------------------
    mlp_weights = [params["mln_w"], params["mln_b"],
                   bf(params["w1"]), params["b1"],
                   bf(params["w2"]), params["b2"]]
    out = pl.pallas_call(
        _make_mlp_kernel(tmlp),
        out_shape=jax.ShapeDtypeStruct((B, T, D), jnp.float32),
        grid_spec=pltpu.PrefetchScalarGridSpec(
            num_scalar_prefetch=0,
            grid=(B, nmlp),
            in_specs=[pl.BlockSpec((1, tmlp, D), lambda b, t: (b, t, 0))]
                     + [_const_spec(w.shape) for w in mlp_weights],
            out_specs=pl.BlockSpec((1, tmlp, D), lambda b, t: (b, t, 0)),
        ),
        compiler_params=pltpu.CompilerParams(
            dimension_semantics=("parallel", "parallel"),
            vmem_limit_bytes=vmem_limit),
    )(x1, *mlp_weights)
    return out


# ---------------------------------------------------------------------------
# Pure-JAX f32 reference (for correctness check)
# ---------------------------------------------------------------------------
def reference_block(x, params, n_head, eps=_EPS):
    def ln(x, w, b):
        mean = jnp.mean(x, axis=-1, keepdims=True)
        var = jnp.mean((x - mean) ** 2, axis=-1, keepdims=True)
        return (x - mean) / jnp.sqrt(var + eps) * w + b

    B, T, D = x.shape
    Dh = D // n_head
    scale = 1.0 / math.sqrt(Dh)

    y = ln(x, params["aln_w"], params["aln_b"])
    q = y @ params["wq"] + params["bq"]
    k = y @ params["wk"]
    v = y @ params["wv"] + params["bv"]

    def split(t):  # (B,T,D) -> (B,H,T,Dh)
        return t.reshape(B, T, n_head, Dh).transpose(0, 2, 1, 3)

    qh, kh, vh = split(q), split(k), split(v)
    s = jnp.einsum("bhtd,bhsd->bhts", qh, kh) * scale
    p = jax.nn.softmax(s, axis=-1)
    a = jnp.einsum("bhts,bhsd->bhtd", p, vh)
    wv = a.transpose(0, 2, 1, 3).reshape(B, T, D)
    x = x + wv @ params["wo"] + params["bo"]

    y = ln(x, params["mln_w"], params["mln_b"])
    h = y @ params["w1"] + params["b1"]
    h = jax.nn.gelu(h, approximate=False)
    x = x + h @ params["w2"] + params["b2"]
    return x


# ---------------------------------------------------------------------------
# Main
# ---------------------------------------------------------------------------
if __name__ == "__main__":
    # small shapes chosen so every grid (batch, row tiles, kv tiles) has >1
    # step on each axis, exercising the multi-tile online-softmax path.
    B, T, D, H = 2, 16, 64, 4      # batch, seq, n_state, n_head
    n_mlp = 4 * D

    key = jax.random.PRNGKey(0)
    keys = jax.random.split(key, 16)

    def init(k, shape, s=0.1):
        return (s * jax.random.normal(k, shape)).astype(jnp.float32)

    # weights stored as (in_features, out_features); biases / LN params as (1, dim)
    params = {
        "aln_w": jnp.ones((1, D), jnp.float32),
        "aln_b": jnp.zeros((1, D), jnp.float32) + 0.01,
        "wq": init(keys[0], (D, D)),
        "bq": init(keys[1], (1, D)),
        "wk": init(keys[2], (D, D)),
        "wv": init(keys[3], (D, D)),
        "bv": init(keys[4], (1, D)),
        "wo": init(keys[5], (D, D)),
        "bo": init(keys[6], (1, D)),
        "mln_w": jnp.ones((1, D), jnp.float32) * 1.1,
        "mln_b": jnp.zeros((1, D), jnp.float32) - 0.02,
        "w1": init(keys[7], (D, n_mlp)),
        "b1": init(keys[8], (1, n_mlp)),
        "w2": init(keys[9], (n_mlp, D)),
        "b2": init(keys[10], (1, D)),
    }

    x = jax.random.normal(keys[11], (B, T, D), jnp.float32)

    out = residual_attention_block(x, params, n_head=H,
                                   tq=8, tk=8, tproj=8, tmlp=8)
    out = jax.block_until_ready(out)

    ref = reference_block(x, params, n_head=H)
    assert out.shape == (B, T, D)
    # bf16 matmuls + approx reciprocal -> relaxed tolerance vs f32 reference
    max_err = float(jnp.max(jnp.abs(out - ref)))
    rel_err = float(jnp.linalg.norm(out - ref) / jnp.linalg.norm(ref))
    assert max_err < 1e-1 and rel_err < 2.5e-2, (
        f"max abs err = {max_err}, rel fro err = {rel_err}")

    print("KERNEL_OK")
</pallas_src>

<mosaic_0001>
module attributes {stable_mosaic.version = 11 : i64} {
  func.func @kernel(%arg0: i32, %arg1: i32, %arg2: memref<1x8x64xf32, #tpu.memory_space<vmem>>, %arg3: memref<1x64xf32, #tpu.memory_space<vmem>>, %arg4: memref<1x64xf32, #tpu.memory_space<vmem>>, %arg5: memref<64x64xbf16, #tpu.memory_space<vmem>>, %arg6: memref<1x64xf32, #tpu.memory_space<vmem>>, %arg7: memref<64x64xbf16, #tpu.memory_space<vmem>>, %arg8: memref<64x64xbf16, #tpu.memory_space<vmem>>, %arg9: memref<1x64xf32, #tpu.memory_space<vmem>>, %arg10: memref<1x4x8x16xbf16, #tpu.memory_space<vmem>>, %arg11: memref<1x4x8x16xbf16, #tpu.memory_space<vmem>>, %arg12: memref<1x4x8x16xbf16, #tpu.memory_space<vmem>>) attributes {dimension_semantics = [#tpu.dimension_semantics<parallel>, #tpu.dimension_semantics<parallel>], iteration_bounds = array<i64: 2, 2>, scalar_prefetch = 0 : i64, scratch_operands = 0 : i64, tpu.core_type = #tpu.core_type<tc>, window_params = [{transform_indices = @transform_0, window_bounds = array<i64: 1, 8, 64>}, {pipeline_mode = #tpu.pipeline_mode<synchronous>, transform_indices = @transform_1, window_bounds = array<i64: 1, 64>}, {pipeline_mode = #tpu.pipeline_mode<synchronous>, transform_indices = @transform_2, window_bounds = array<i64: 1, 64>}, {pipeline_mode = #tpu.pipeline_mode<synchronous>, transform_indices = @transform_3, window_bounds = array<i64: 64, 64>}, {pipeline_mode = #tpu.pipeline_mode<synchronous>, transform_indices = @transform_4, window_bounds = array<i64: 1, 64>}, {pipeline_mode = #tpu.pipeline_mode<synchronous>, transform_indices = @transform_5, window_bounds = array<i64: 64, 64>}, {pipeline_mode = #tpu.pipeline_mode<synchronous>, transform_indices = @transform_6, window_bounds = array<i64: 64, 64>}, {pipeline_mode = #tpu.pipeline_mode<synchronous>, transform_indices = @transform_7, window_bounds = array<i64: 1, 64>}, {transform_indices = @transform_8, window_bounds = array<i64: 1, 4, 8, 16>}, {transform_indices = @transform_9, window_bounds = array<i64: 1, 4, 8, 16>}, {transform_indices = @transform_10, window_bounds = array<i64: 1, 4, 8, 16>}]} {
    %c0 = arith.constant 0 : index
    %c0_0 = arith.constant 0 : index
    %c0_1 = arith.constant 0 : index
    %0 = vector.load %arg2[%c0, %c0_0, %c0_1] : memref<1x8x64xf32, #tpu.memory_space<vmem>>, vector<1x8x64xf32>
    %1 = vector.shape_cast %0 : vector<1x8x64xf32> to vector<8x64xf32>
    %c0_2 = arith.constant 0 : index
    %c0_3 = arith.constant 0 : index
    %2 = vector.load %arg3[%c0_2, %c0_3] : memref<1x64xf32, #tpu.memory_space<vmem>>, vector<1x64xf32>
    %c0_4 = arith.constant 0 : index
    %c0_5 = arith.constant 0 : index
    %3 = vector.load %arg4[%c0_4, %c0_5] : memref<1x64xf32, #tpu.memory_space<vmem>>, vector<1x64xf32>
    %cst = arith.constant dense<0.000000e+00> : vector<8xf32>
    %4 = vector.multi_reduction <add>, %1, %cst [1] : vector<8x64xf32> to vector<8xf32>
    %5 = vector.shape_cast %4 : vector<8xf32> to vector<8x1xf32>
    %cst_6 = arith.constant 6.400000e+01 : f32
    %6 = vector.broadcast %cst_6 : f32 to vector<8x1xf32>
    %7 = arith.divf %5, %6 : vector<8x1xf32>
    %8 = vector.broadcast %7 : vector<8x1xf32> to vector<8x64xf32>
    %9 = arith.subf %1, %8 : vector<8x64xf32>
    %10 = arith.mulf %9, %9 : vector<8x64xf32>
    %cst_7 = arith.constant dense<0.000000e+00> : vector<8xf32>
    %11 = vector.multi_reduction <add>, %10, %cst_7 [1] : vector<8x64xf32> to vector<8xf32>
    %12 = vector.shape_cast %11 : vector<8xf32> to vector<8x1xf32>
    %cst_8 = arith.constant 6.400000e+01 : f32
    %13 = vector.broadcast %cst_8 : f32 to vector<8x1xf32>
    %14 = arith.divf %12, %13 : vector<8x1xf32>
    %15 = vector.broadcast %7 : vector<8x1xf32> to vector<8x64xf32>
    %16 = arith.subf %1, %15 : vector<8x64xf32>
    %cst_9 = arith.constant 9.99999974E-6 : f32
    %17 = vector.broadcast %cst_9 : f32 to vector<8x1xf32>
    %18 = arith.addf %14, %17 : vector<8x1xf32>
    %19 = math.rsqrt %18 : vector<8x1xf32>
    %20 = vector.broadcast %19 : vector<8x1xf32> to vector<8x64xf32>
    %21 = arith.mulf %16, %20 : vector<8x64xf32>
    %22 = vector.broadcast %2 : vector<1x64xf32> to vector<8x64xf32>
    %23 = arith.mulf %21, %22 : vector<8x64xf32>
    %24 = vector.broadcast %3 : vector<1x64xf32> to vector<8x64xf32>
    %25 = arith.addf %23, %24 : vector<8x64xf32>
    %26 = arith.truncf %25 : vector<8x64xf32> to vector<8x64xbf16>
    %c0_10 = arith.constant 0 : index
    %c0_11 = arith.constant 0 : index
    %27 = vector.load %arg5[%c0_10, %c0_11] : memref<64x64xbf16, #tpu.memory_space<vmem>>, vector<64x64xbf16>
    %cst_12 = arith.constant dense<0.000000e+00> : vector<8x64xf32>
    %28 = tpu.matmul %26, %27, %cst_12 {dimension_numbers = #tpu.dot_dimension_numbers<[1], [0], [0], [1], [0, 0, 1, 1], [], []>} : vector<8x64xbf16>, vector<64x64xbf16>, vector<8x64xf32> -> vector<8x64xf32>
    %c0_13 = arith.constant 0 : index
    %c0_14 = arith.constant 0 : index
    %29 = vector.load %arg6[%c0_13, %c0_14] : memref<1x64xf32, #tpu.memory_space<vmem>>, vector<1x64xf32>
    %30 = vector.broadcast %29 : vector<1x64xf32> to vector<8x64xf32>
    %31 = arith.addf %28, %30 : vector<8x64xf32>
    %c0_15 = arith.constant 0 : index
    %c0_16 = arith.constant 0 : index
    %32 = vector.load %arg7[%c0_15, %c0_16] : memref<64x64xbf16, #tpu.memory_space<vmem>>, vector<64x64xbf16>
    %cst_17 = arith.constant dense<0.000000e+00> : vector<8x64xf32>
    %33 = tpu.matmul %26, %32, %cst_17 {dimension_numbers = #tpu.dot_dimension_numbers<[1], [0], [0], [1], [0, 0, 1, 1], [], []>} : vector<8x64xbf16>, vector<64x64xbf16>, vector<8x64xf32> -> vector<8x64xf32>
    %c0_18 = arith.constant 0 : index
    %c0_19 = arith.constant 0 : index
    %34 = vector.load %arg8[%c0_18, %c0_19] : memref<64x64xbf16, #tpu.memory_space<vmem>>, vector<64x64xbf16>
    %cst_20 = arith.constant dense<0.000000e+00> : vector<8x64xf32>
    %35 = tpu.matmul %26, %34, %cst_20 {dimension_numbers = #tpu.dot_dimension_numbers<[1], [0], [0], [1], [0, 0, 1, 1], [], []>} : vector<8x64xbf16>, vector<64x64xbf16>, vector<8x64xf32> -> vector<8x64xf32>
    %c0_21 = arith.constant 0 : index
    %c0_22 = arith.constant 0 : index
    %36 = vector.load %arg9[%c0_21, %c0_22] : memref<1x64xf32, #tpu.memory_space<vmem>>, vector<1x64xf32>
    %37 = vector.broadcast %36 : vector<1x64xf32> to vector<8x64xf32>
    %38 = arith.addf %35, %37 : vector<8x64xf32>
    %39 = vector.shape_cast %31 : vector<8x64xf32> to vector<8x4x16xf32>
    %40 = tpu.transpose %39, [1, 0, 2] : vector<8x4x16xf32> -> vector<4x8x16xf32>
    %41 = arith.truncf %40 : vector<4x8x16xf32> to vector<4x8x16xbf16>
    %c0_23 = arith.constant 0 : index
    %c0_24 = arith.constant 0 : index
    %c0_25 = arith.constant 0 : index
    %c0_26 = arith.constant 0 : index
    %42 = vector.load %arg10[%c0_23, %c0_24, %c0_25, %c0_26] : memref<1x4x8x16xbf16, #tpu.memory_space<vmem>>, vector<1x4x8x16xbf16>
    %43 = vector.shape_cast %42 : vector<1x4x8x16xbf16> to vector<4x8x16xbf16>
    %44 = vector.shape_cast %41 : vector<4x8x16xbf16> to vector<1x4x8x16xbf16>
    tpu.vector_store %arg10[%c0_23, %c0_24, %c0_25, %c0_26], %44 {strides = array<i32>} : memref<1x4x8x16xbf16, #tpu.memory_space<vmem>>, vector<1x4x8x16xbf16>,
    %45 = vector.shape_cast %33 : vector<8x64xf32> to vector<8x4x16xf32>
    %46 = tpu.transpose %45, [1, 0, 2] : vector<8x4x16xf32> -> vector<4x8x16xf32>
    %47 = arith.truncf %46 : vector<4x8x16xf32> to vector<4x8x16xbf16>
    %c0_27 = arith.constant 0 : index
    %c0_28 = arith.constant 0 : index
    %c0_29 = arith.constant 0 : index
    %c0_30 = arith.constant 0 : index
    %48 = vector.load %arg11[%c0_27, %c0_28, %c0_29, %c0_30] : memref<1x4x8x16xbf16, #tpu.memory_space<vmem>>, vector<1x4x8x16xbf16>
    %49 = vector.shape_cast %48 : vector<1x4x8x16xbf16> to vector<4x8x16xbf16>
    %50 = vector.shape_cast %47 : vector<4x8x16xbf16> to vector<1x4x8x16xbf16>
    tpu.vector_store %arg11[%c0_27, %c0_28, %c0_29, %c0_30], %50 {strides = array<i32>} : memref<1x4x8x16xbf16, #tpu.memory_space<vmem>>, vector<1x4x8x16xbf16>,
    %51 = vector.shape_cast %38 : vector<8x64xf32> to vector<8x4x16xf32>
    %52 = tpu.transpose %51, [1, 0, 2] : vector<8x4x16xf32> -> vector<4x8x16xf32>
    %53 = arith.truncf %52 : vector<4x8x16xf32> to vector<4x8x16xbf16>
    %c0_31 = arith.constant 0 : index
    %c0_32 = arith.constant 0 : index
    %c0_33 = arith.constant 0 : index
    %c0_34 = arith.constant 0 : index
    %54 = vector.load %arg12[%c0_31, %c0_32, %c0_33, %c0_34] : memref<1x4x8x16xbf16, #tpu.memory_space<vmem>>, vector<1x4x8x16xbf16>
    %55 = vector.shape_cast %54 : vector<1x4x8x16xbf16> to vector<4x8x16xbf16>
    %56 = vector.shape_cast %53 : vector<4x8x16xbf16> to vector<1x4x8x16xbf16>
    tpu.vector_store %arg12[%c0_31, %c0_32, %c0_33, %c0_34], %56 {strides = array<i32>} : memref<1x4x8x16xbf16, #tpu.memory_space<vmem>>, vector<1x4x8x16xbf16>,
    return
  }
  func.func @transform_0(%arg0: i32, %arg1: i32) -> (i32, i32, i32) {
    %c0_i32 = arith.constant 0 : i32
    %c0_i32_0 = arith.constant 0 : i32
    return %arg0, %arg1, %c0_i32 : i32, i32, i32
  }
  func.func @transform_1(%arg0: i32, %arg1: i32) -> (i32, i32) {
    %c0_i32 = arith.constant 0 : i32
    %c0_i32_0 = arith.constant 0 : i32
    %c0_i32_1 = arith.constant 0 : i32
    return %c0_i32, %c0_i32_0 : i32, i32
  }
  func.func @transform_2(%arg0: i32, %arg1: i32) -> (i32, i32) {
    %c0_i32 = arith.constant 0 : i32
    %c0_i32_0 = arith.constant 0 : i32
    %c0_i32_1 = arith.constant 0 : i32
    return %c0_i32, %c0_i32_0 : i32, i32
  }
  func.func @transform_3(%arg0: i32, %arg1: i32) -> (i32, i32) {
    %c0_i32 = arith.constant 0 : i32
    %c0_i32_0 = arith.constant 0 : i32
    %c0_i32_1 = arith.constant 0 : i32
    return %c0_i32, %c0_i32_0 : i32, i32
  }
  func.func @transform_4(%arg0: i32, %arg1: i32) -> (i32, i32) {
    %c0_i32 = arith.constant 0 : i32
    %c0_i32_0 = arith.constant 0 : i32
    %c0_i32_1 = arith.constant 0 : i32
    return %c0_i32, %c0_i32_0 : i32, i32
  }
  func.func @transform_5(%arg0: i32, %arg1: i32) -> (i32, i32) {
    %c0_i32 = arith.constant 0 : i32
    %c0_i32_0 = arith.constant 0 : i32
    %c0_i32_1 = arith.constant 0 : i32
    return %c0_i32, %c0_i32_0 : i32, i32
  }
  func.func @transform_6(%arg0: i32, %arg1: i32) -> (i32, i32) {
    %c0_i32 = arith.constant 0 : i32
    %c0_i32_0 = arith.constant 0 : i32
    %c0_i32_1 = arith.constant 0 : i32
    return %c0_i32, %c0_i32_0 : i32, i32
  }
  func.func @transform_7(%arg0: i32, %arg1: i32) -> (i32, i32) {
    %c0_i32 = arith.constant 0 : i32
    %c0_i32_0 = arith.constant 0 : i32
    %c0_i32_1 = arith.constant 0 : i32
    return %c0_i32, %c0_i32_0 : i32, i32
  }
  func.func @transform_8(%arg0: i32, %arg1: i32) -> (i32, i32, i32, i32) {
    %c0_i32 = arith.constant 0 : i32
    %c0_i32_0 = arith.constant 0 : i32
    %c0_i32_1 = arith.constant 0 : i32
    return %arg0, %c0_i32, %arg1, %c0_i32_0 : i32, i32, i32, i32
  }
  func.func @transform_9(%arg0: i32, %arg1: i32) -> (i32, i32, i32, i32) {
    %c0_i32 = arith.constant 0 : i32
    %c0_i32_0 = arith.constant 0 : i32
    %c0_i32_1 = arith.constant 0 : i32
    return %arg0, %c0_i32, %arg1, %c0_i32_0 : i32, i32, i32, i32
  }
  func.func @transform_10(%arg0: i32, %arg1: i32) -> (i32, i32, i32, i32) {
    %c0_i32 = arith.constant 0 : i32
    %c0_i32_0 = arith.constant 0 : i32
    %c0_i32_1 = arith.constant 0 : i32
    return %arg0, %c0_i32, %arg1, %c0_i32_0 : i32, i32, i32, i32
  }
}

</mosaic_0001>

<llo_original>
// kernel: tpu_custom_call.1
$region0: #{tpu_custom_call.1}
  #allocation0 [shape = 'u32[]', space=smem, size = 0x4, offset = 0x4, fixed_abs, tag = 'smem constant byte address 0x4 - core index']
  #allocation1 [shape = 'u32[144,128]{1,0:T(1,128)}', space=vmem, size = 0x12000, scoped, tag = 'internal scratch']
  %s0 = inlined_call_operand.hbm [shape: f32[2,16,64], index: 0, kind: input, shape index: {}]
  %s1 = inlined_call_operand.hbm [shape: f32[1,64], index: 1, kind: input, shape index: {}]
  %s2 = inlined_call_operand.hbm [shape: f32[1,64], index: 2, kind: input, shape index: {}]
  %s3 = inlined_call_operand.hbm [shape: bf16[64,64], index: 3, kind: input, shape index: {}]
  %s4 = inlined_call_operand.hbm [shape: f32[1,64], index: 4, kind: input, shape index: {}]
  %s5 = inlined_call_operand.hbm [shape: bf16[64,64], index: 5, kind: input, shape index: {}]
  %s6 = inlined_call_operand.hbm [shape: bf16[64,64], index: 6, kind: input, shape index: {}]
  %s7 = inlined_call_operand.hbm [shape: f32[1,64], index: 7, kind: input, shape index: {}]
  %s8 = inlined_call_operand.hbm [shape: bf16[2,4,16,16], index: 8, kind: output, shape index: {0}]
  %s9 = inlined_call_operand.hbm [shape: bf16[2,4,16,16], index: 9, kind: output, shape index: {1}]
  %s10 = inlined_call_operand.hbm [shape: bf16[2,4,16,16], index: 10, kind: output, shape index: {2}]
  %11 = xla_tuple %s8, %s9, %s10
  %s12 = sld [smem:[#allocation0]]
  $region113: #{tpu_custom_call.1} parent=0
    _
  %s14 = ssub.s32 1, %s12
  %s15 = scalar_select 0, %s14, %s12
  $region1: #{tpu_custom_call.1} parent=0
    #allocation2 [shape = 'u8[8192]{0}', space=vmem, size = 0x2000, scoped, tag = 'input window, operand 0']
    #allocation3 [shape = 's32[2]{0}', space=sflag, size = 0x8, scoped, tag = 'scoped memory for tpu_custom_call.1']
    #allocation4 [shape = 's32[2]{0}', space=sflag, size = 0x8, scoped, tag = 'scoped memory for tpu_custom_call.1']
    #allocation5 [shape = 'u8[512]{0}', space=vmem, size = 0x400, scoped, tag = 'input window, operand 1, single buffered']
    #allocation6 [shape = 's32[1]{0}', space=sflag, size = 0x4, scoped, tag = 'scoped memory for tpu_custom_call.1']
    #allocation7 [shape = 'u8[512]{0}', space=vmem, size = 0x400, scoped, tag = 'input window, operand 2, single buffered']
    #allocation8 [shape = 'u8[16384]{0}', space=vmem, size = 0x4000, scoped, tag = 'input window, operand 3, single buffered']
    #allocation9 [shape = 's32[1]{0}', space=sflag, size = 0x4, scoped, tag = 'scoped memory for tpu_custom_call.1']
    #allocation10 [shape = 'u8[512]{0}', space=vmem, size = 0x400, scoped, tag = 'input window, operand 4, single buffered']
    #allocation11 [shape = 'u8[16384]{0}', space=vmem, size = 0x4000, scoped, tag = 'input window, operand 5, single buffered']
    #allocation12 [shape = 's32[1]{0}', space=sflag, size = 0x4, scoped, tag = 'scoped memory for tpu_custom_call.1']
    #allocation13 [shape = 'u8[16384]{0}', space=vmem, size = 0x4000, scoped, tag = 'input window, operand 6, single buffered']
    #allocation14 [shape = 'u8[512]{0}', space=vmem, size = 0x400, scoped, tag = 'input window, operand 7, single buffered']
    #allocation15 [shape = 's32[1]{0}', space=sflag, size = 0x4, scoped, tag = 'scoped memory for tpu_custom_call.1']
    #allocation16 [shape = 'u8[16384]{0}', space=vmem, size = 0x4000, scoped, tag = 'output window, operand 0']
    #allocation17 [shape = 'u8[16384]{0}', space=vmem, size = 0x4000, scoped, tag = 'output window, operand 1']
    #allocation18 [shape = 's32[2]{0}', space=sflag, size = 0x8, scoped, tag = 'scoped memory for tpu_custom_call.1']
    #allocation19 [shape = 'u8[16384]{0}', space=vmem, size = 0x4000, scoped, tag = 'output window, operand 2']
    %16 = vsyncpa [#allocation3], 0
    %s17 = scalar_lea.sflag [#allocation3], 1
    %18 = vsyncpa %s17, 0
    %19 = vsyncpa [#allocation6], 0
    %20 = vsyncpa [#allocation9], 0
    %21 = vsyncpa [#allocation12], 0
    %22 = vsyncpa [#allocation15], 0
    %23 = vsyncpa [#allocation4], 0
    %s24 = scalar_lea.sflag [#allocation4], 1
    %25 = vsyncpa %s24, 0
    %26 = vsyncpa [#allocation18], 0
    %s27 = scalar_lea.sflag [#allocation18], 1
    %28 = vsyncpa %s27, 0
    loop: start=0, step=1, limit=6
    $region2: #{tpu_custom_call.1} parent=1 // loop_pre_header
      _
    $region3: #{tpu_custom_call.1} parent=1 // loop_header
      %s30 = sphi 0, %s34
      %p31 = scmp.ge.s32.totalorder %s30, 6
      %s37 = sphi 0, %s49
      %s38 = sphi 0, %s45
      %s39 = sphi 0, %s37
      %s40 = sphi 0, %s38
      %s41 = sphi 0, %s39
      %s42 = sphi 0, %s40
      %s54 = sphi 0, %s56
      %s57 = sphi 0, %s54
      %s58 = sphi 0, %s57
      %s74 = sphi 0, %s58
      %s78 = sphi 0, %s78
      %s80 = sphi 0, %s78
      %s81 = sphi 0, %s80
      %s95 = sphi 0, %s81
      %s99 = sphi 0, %s99
      %s101 = sphi 0, %s99
      %s102 = sphi 0, %s101
      %s116 = sphi 0, %s102
      %s120 = sphi 0, %s120
      %s122 = sphi 0, %s120
      %s123 = sphi 0, %s122
      %s137 = sphi 0, %s123
      %s141 = sphi 0, %s141
      %s143 = sphi 0, %s141
      %s144 = sphi 0, %s143
      %s158 = sphi 0, %s144
      %s162 = sphi 0, %s162
      %s164 = sphi 0, %s162
      %s165 = sphi 0, %s164
      %s179 = sphi 0, %s165
      %s183 = sphi 0, %s183
      %s185 = sphi 0, %s183
      %s186 = sphi 0, %s185
      %s200 = sphi 0, %s186
      %s204 = sphi 0, %s204
      %s206 = sphi 0, %s204
      %s207 = sphi 0, %s206
      %s221 = sphi 0, %s207
      %s229 = sphi 0, %s231
      %s232 = sphi 0, %s229
      %s233 = sphi 0, %s232
      %s249 = sphi 0, %s233
      %s257 = sphi 0, %s259
      %s260 = sphi 0, %s257
      %s261 = sphi 0, %s260
      %s277 = sphi 0, %s261
      %s285 = sphi 0, %s287
      %s288 = sphi 0, %s285
      %s289 = sphi 0, %s288
      %s305 = sphi 0, %s289
    $region4: #{tpu_custom_call.1} parent=1 // loop_header_branch
      %33 = sbr.rel (%p31) target = $region8
    $region5: #{tpu_custom_call.1} parent=1 // loop_body
      %s35 = ssub.s32 %s30, 1
      %s36 = ssub.s32 %s30, 2
      %s43 = sadd.s32 1, %s38
      %p44 = scmp.ge.s32.totalorder %s43, 2
      %s45 = scalar_select %p44, 0, %s43
      %s46 = sadd.s32 1, %s37
      %s47 = scalar_select %p44, %s46, %s37
      %p48 = scmp.ge.s32.totalorder %s47, 2
      %s49 = scalar_select %p48, 0, %s47
      %s50 = ssub.s32 %s37, %s49
      %s51 = ssub.s32 %s38, %s45
      %s52 = sor.u32 %s50, %s51
      %p53 = scmp.eq.s32.totalorder %s52, 0
      %s55 = sadd.s32 %s54, 1
      %s56 = scalar_select %p53, %s54, %s55
      %p59 = pneg %p53
      %p60 = scmp.eq.s32.totalorder %s30, 3
      %p61 = por %p59, %p60
      %p62 = scmp.ne.s32.totalorder %s54, %s57
      %p63 = scmp.eq.s32.totalorder %s30, 0
      %p64 = por %p62, %p63
      %p65 = scmp.ne.s32.totalorder %s54, %s57
      %p66 = scmp.eq.s32.totalorder %s35, 3
      %p67 = por %p65, %p66
      %p68 = scmp.ne.s32.totalorder %s57, %s58
      %p69 = scmp.eq.s32.totalorder %s35, 0
      %p70 = por %p68, %p69
      %p71 = scmp.ne.s32.totalorder %s57, %s58
      %p72 = scmp.eq.s32.totalorder %s36, 3
      %p73 = por %p71, %p72
      %p75 = scmp.ne.s32.totalorder %s58, %s74
      %p76 = scmp.eq.s32.totalorder %s36, 0
      %p77 = por %p75, %p76
      %s79 = sadd.s32 %s78, 1
      %p82 = scmp.eq.s32.totalorder %s30, 3
      %p83 = scmp.ne.s32.totalorder %s78, %s80
      %p84 = scmp.eq.s32.totalorder %s30, 0
      %p85 = por %p83, %p84
      %p86 = scmp.ne.s32.totalorder %s78, %s80
      %p87 = scmp.eq.s32.totalorder %s35, 3
      %p88 = por %p86, %p87
      %p89 = scmp.ne.s32.totalorder %s80, %s81
      %p90 = scmp.eq.s32.totalorder %s35, 0
      %p91 = por %p89, %p90
      %p92 = scmp.ne.s32.totalorder %s80, %s81
      %p93 = scmp.eq.s32.totalorder %s36, 3
      %p94 = por %p92, %p93
      %p96 = scmp.ne.s32.totalorder %s81, %s95
      %p97 = scmp.eq.s32.totalorder %s36, 0
      %p98 = por %p96, %p97
      %s100 = sadd.s32 %s99, 1
      %p103 = scmp.eq.s32.totalorder %s30, 3
      %p104 = scmp.ne.s32.totalorder %s99, %s101
      %p105 = scmp.eq.s32.totalorder %s30, 0
      %p106 = por %p104, %p105
      %p107 = scmp.ne.s32.totalorder %s99, %s101
      %p108 = scmp.eq.s32.totalorder %s35, 3
      %p109 = por %p107, %p108
      %p110 = scmp.ne.s32.totalorder %s101, %s102
      %p111 = scmp.eq.s32.totalorder %s35, 0
      %p112 = por %p110, %p111
      %p113 = scmp.ne.s32.totalorder %s101, %s102
      %p114 = scmp.eq.s32.totalorder %s36, 3
      %p115 = por %p113, %p114
      %p117 = scmp.ne.s32.totalorder %s102, %s116
      %p118 = scmp.eq.s32.totalorder %s36, 0
      %p119 = por %p117, %p118
      %s121 = sadd.s32 %s120, 1
      %p124 = scmp.eq.s32.totalorder %s30, 3
      %p125 = scmp.ne.s32.totalorder %s120, %s122
      %p126 = scmp.eq.s32.totalorder %s30, 0
      %p127 = por %p125, %p126
      %p128 = scmp.ne.s32.totalorder %s120, %s122
      %p129 = scmp.eq.s32.totalorder %s35, 3
      %p130 = por %p128, %p129
      %p131 = scmp.ne.s32.totalorder %s122, %s123
      %p132 = scmp.eq.s32.totalorder %s35, 0
      %p133 = por %p131, %p132
      %p134 = scmp.ne.s32.totalorder %s122, %s123
      %p135 = scmp.eq.s32.totalorder %s36, 3
      %p136 = por %p134, %p135
      %p138 = scmp.ne.s32.totalorder %s123, %s137
      %p139 = scmp.eq.s32.totalorder %s36, 0
      %p140 = por %p138, %p139
      %s142 = sadd.s32 %s141, 1
      %p145 = scmp.eq.s32.totalorder %s30, 3
      %p146 = scmp.ne.s32.totalorder %s141, %s143
      %p147 = scmp.eq.s32.totalorder %s30, 0
      %p148 = por %p146, %p147
      %p149 = scmp.ne.s32.totalorder %s141, %s143
      %p150 = scmp.eq.s32.totalorder %s35, 3
      %p151 = por %p149, %p150
      %p152 = scmp.ne.s32.totalorder %s143, %s144
      %p153 = scmp.eq.s32.totalorder %s35, 0
      %p154 = por %p152, %p153
      %p155 = scmp.ne.s32.totalorder %s143, %s144
      %p156 = scmp.eq.s32.totalorder %s36, 3
      %p157 = por %p155, %p156
      %p159 = scmp.ne.s32.totalorder %s144, %s158
      %p160 = scmp.eq.s32.totalorder %s36, 0
      %p161 = por %p159, %p160
      %s163 = sadd.s32 %s162, 1
      %p166 = scmp.eq.s32.totalorder %s30, 3
      %p167 = scmp.ne.s32.totalorder %s162, %s164
      %p168 = scmp.eq.s32.totalorder %s30, 0
      %p169 = por %p167, %p168
      %p170 = scmp.ne.s32.totalorder %s162, %s164
      %p171 = scmp.eq.s32.totalorder %s35, 3
      %p172 = por %p170, %p171
      %p173 = scmp.ne.s32.totalorder %s164, %s165
      %p174 = scmp.eq.s32.totalorder %s35, 0
      %p175 = por %p173, %p174
      %p176 = scmp.ne.s32.totalorder %s164, %s165
      %p177 = scmp.eq.s32.totalorder %s36, 3
      %p178 = por %p176, %p177
      %p180 = scmp.ne.s32.totalorder %s165, %s179
      %p181 = scmp.eq.s32.totalorder %s36, 0
      %p182 = por %p180, %p181
      %s184 = sadd.s32 %s183, 1
      %p187 = scmp.eq.s32.totalorder %s30, 3
      %p188 = scmp.ne.s32.totalorder %s183, %s185
      %p189 = scmp.eq.s32.totalorder %s30, 0
      %p190 = por %p188, %p189
      %p191 = scmp.ne.s32.totalorder %s183, %s185
      %p192 = scmp.eq.s32.totalorder %s35, 3
      %p193 = por %p191, %p192
      %p194 = scmp.ne.s32.totalorder %s185, %s186
      %p195 = scmp.eq.s32.totalorder %s35, 0
      %p196 = por %p194, %p195
      %p197 = scmp.ne.s32.totalorder %s185, %s186
      %p198 = scmp.eq.s32.totalorder %s36, 3
      %p199 = por %p197, %p198
      %p201 = scmp.ne.s32.totalorder %s186, %s200
      %p202 = scmp.eq.s32.totalorder %s36, 0
      %p203 = por %p201, %p202
      %s205 = sadd.s32 %s204, 1
      %p208 = scmp.eq.s32.totalorder %s30, 3
      %p209 = scmp.ne.s32.totalorder %s204, %s206
      %p210 = scmp.eq.s32.totalorder %s30, 0
      %p211 = por %p209, %p210
      %p212 = scmp.ne.s32.totalorder %s204, %s206
      %p213 = scmp.eq.s32.totalorder %s35, 3
      %p214 = por %p212, %p213
      %p215 = scmp.ne.s32.totalorder %s206, %s207
      %p216 = scmp.eq.s32.totalorder %s35, 0
      %p217 = por %p215, %p216
      %p218 = scmp.ne.s32.totalorder %s206, %s207
      %p219 = scmp.eq.s32.totalorder %s36, 3
      %p220 = por %p218, %p219
      %p222 = scmp.ne.s32.totalorder %s207, %s221
      %p223 = scmp.eq.s32.totalorder %s36, 0
      %p224 = por %p222, %p223
      %s225 = ssub.s32 %s37, %s49
      %s226 = ssub.s32 %s38, %s45
      %s227 = sor.u32 %s225, %s226
      %p228 = scmp.eq.s32.totalorder %s227, 0
      %s230 = sadd.s32 %s229, 1
      %s231 = scalar_select %p228, %s229, %s230
      %p234 = pneg %p228
      %p235 = scmp.eq.s32.totalorder %s30, 3
      %p236 = por %p234, %p235
      %p237 = scmp.ne.s32.totalorder %s229, %s232
      %p238 = scmp.eq.s32.totalorder %s30, 0
      %p239 = por %p237, %p238
      %p240 = scmp.ne.s32.totalorder %s229, %s232
      %p241 = scmp.eq.s32.totalorder %s35, 3
      %p242 = por %p240, %p241
      %p243 = scmp.ne.s32.totalorder %s232, %s233
      %p244 = scmp.eq.s32.totalorder %s35, 0
      %p245 = por %p243, %p244
      %p246 = scmp.ne.s32.totalorder %s232, %s233
      %p247 = scmp.eq.s32.totalorder %s36, 3
      %p248 = por %p246, %p247
      %p250 = scmp.ne.s32.totalorder %s233, %s249
      %p251 = scmp.eq.s32.totalorder %s36, 0
      %p252 = por %p250, %p251
      %s253 = ssub.s32 %s37, %s49
      %s254 = ssub.s32 %s38, %s45
      %s255 = sor.u32 %s253, %s254
      %p256 = scmp.eq.s32.totalorder %s255, 0
      %s258 = sadd.s32 %s257, 1
      %s259 = scalar_select %p256, %s257, %s258
      %p262 = pneg %p256
      %p263 = scmp.eq.s32.totalorder %s30, 3
      %p264 = por %p262, %p263
      %p265 = scmp.ne.s32.totalorder %s257, %s260
      %p266 = scmp.eq.s32.totalorder %s30, 0
      %p267 = por %p265, %p266
      %p268 = scmp.ne.s32.totalorder %s257, %s260
      %p269 = scmp.eq.s32.totalorder %s35, 3
      %p270 = por %p268, %p269
      %p271 = scmp.ne.s32.totalorder %s260, %s261
      %p272 = scmp.eq.s32.totalorder %s35, 0
      %p273 = por %p271, %p272
      %p274 = scmp.ne.s32.totalorder %s260, %s261
      %p275 = scmp.eq.s32.totalorder %s36, 3
      %p276 = por %p274, %p275
      %p278 = scmp.ne.s32.totalorder %s261, %s277
      %p279 = scmp.eq.s32.totalorder %s36, 0
      %p280 = por %p278, %p279
      %s281 = ssub.s32 %s37, %s49
      %s282 = ssub.s32 %s38, %s45
      %s283 = sor.u32 %s281, %s282
      %p284 = scmp.eq.s32.totalorder %s283, 0
      %s286 = sadd.s32 %s285, 1
      %s287 = scalar_select %p284, %s285, %s286
      %p290 = pneg %p284
      %p291 = scmp.eq.s32.totalorder %s30, 3
      %p292 = por %p290, %p291
      %p293 = scmp.ne.s32.totalorder %s285, %s288
      %p294 = scmp.eq.s32.totalorder %s30, 0
      %p295 = por %p293, %p294
      %p296 = scmp.ne.s32.totalorder %s285, %s288
      %p297 = scmp.eq.s32.totalorder %s35, 3
      %p298 = por %p296, %p297
      %p299 = scmp.ne.s32.totalorder %s288, %s289
      %p300 = scmp.eq.s32.totalorder %s35, 0
      %p301 = por %p299, %p300
      %p302 = scmp.ne.s32.totalorder %s288, %s289
      %p303 = scmp.eq.s32.totalorder %s36, 3
      %p304 = por %p302, %p303
      %p306 = scmp.ne.s32.totalorder %s289, %s305
      %p307 = scmp.eq.s32.totalorder %s36, 0
      %p308 = por %p306, %p307
      %p309 = scmp.le.s32.totalorder 1, %s30
      %p310 = scmp.lt.s32.totalorder %s30, 5
      %p311 = pnand %p309, %p310
      %p312 = pneg %p311
      // Predicated region
      $region9: #{tpu_custom_call.1} parent=5 // pred_check
        _
      $region10: #{tpu_custom_call.1} parent=5 // pred_check_branch
        %314 = sbr.rel (%p311) target = $region12
      $region11: #{tpu_custom_call.1} parent=5 // pred_region
        %s315 = ssub.s32 %s30, 1
        // Predicated region
        $region13: #{tpu_custom_call.1} parent=11 // pred_check
          %p316 = pneg %p91
        $region14: #{tpu_custom_call.1} parent=11 // pred_check_branch
          %318 = sbr.rel (%p316) target = $region16
        $region15: #{tpu_custom_call.1} parent=11 // pred_region
          %s320 = ssub.s32 16, 16
          %321 = vsyncadd [#allocation6], %s320
          %s323 = sshll.u32 [#allocation5], 4
          %s324 = int_to_ptr.vmem [resolvable:$true] %s323
          %326 = dma.hbm_to_vmem [thread:$0]  %s1, 16, %s324, [#allocation6]
        $region16: #{tpu_custom_call.1} parent=11 // pred_fallthru
          _
        // Predicated region
        $region17: #{tpu_custom_call.1} parent=11 // pred_check
          %p327 = pneg %p112
        $region18: #{tpu_custom_call.1} parent=11 // pred_check_branch
          %329 = sbr.rel (%p327) target = $region20
        $region19: #{tpu_custom_call.1} parent=11 // pred_region
          %s331 = ssub.s32 16, 16
          %332 = vsyncadd [#allocation6], %s331
          %s334 = sshll.u32 [#allocation7], 4
          %s335 = int_to_ptr.vmem [resolvable:$true] %s334
          %337 = dma.hbm_to_vmem [thread:$0]  %s2, 16, %s335, [#allocation6]
        $region20: #{tpu_custom_call.1} parent=11 // pred_fallthru
          _
        // Predicated region
        $region21: #{tpu_custom_call.1} parent=11 // pred_check
          %p338 = pneg %p133
        $region22: #{tpu_custom_call.1} parent=11 // pred_check_branch
          %340 = sbr.rel (%p338) target = $region24
        $region23: #{tpu_custom_call.1} parent=11 // pred_region
          %s342 = ssub.s32 512, 512
          %343 = vsyncadd [#allocation9], %s342
          %s344 = sshll.u32 [#allocation8], 4
          %s345 = int_to_ptr.vmem [resolvable:$true] %s344
          %350 = dma.hbm_to_vmem [thread:$0]  %s3, 512, %s345, [#allocation9], 64, 64, 4
        $region24: #{tpu_custom_call.1} parent=11 // pred_fallthru
          _
        // Predicated region
        $region25: #{tpu_custom_call.1} parent=11 // pred_check
          %p351 = pneg %p154
        $region26: #{tpu_custom_call.1} parent=11 // pred_check_branch
          %353 = sbr.rel (%p351) target = $region28
        $region27: #{tpu_custom_call.1} parent=11 // pred_region
          %s355 = ssub.s32 16, 16
          %356 = vsyncadd [#allocation9], %s355
          %s358 = sshll.u32 [#allocation10], 4
          %s359 = int_to_ptr.vmem [resolvable:$true] %s358
          %361 = dma.hbm_to_vmem [thread:$0]  %s4, 16, %s359, [#allocation9]
        $region28: #{tpu_custom_call.1} parent=11 // pred_fallthru
          _
        // Predicated region
        $region29: #{tpu_custom_call.1} parent=11 // pred_check
          %p362 = pneg %p175
        $region30: #{tpu_custom_call.1} parent=11 // pred_check_branch
          %364 = sbr.rel (%p362) target = $region32
        $region31: #{tpu_custom_call.1} parent=11 // pred_region
          %s366 = ssub.s32 512, 512
          %367 = vsyncadd [#allocation12], %s366
          %s368 = sshll.u32 [#allocation11], 4
          %s369 = int_to_ptr.vmem [resolvable:$true] %s368
          %374 = dma.hbm_to_vmem [thread:$0]  %s5, 512, %s369, [#allocation12], 64, 64, 4
        $region32: #{tpu_custom_call.1} parent=11 // pred_fallthru
          _
        // Predicated region
        $region33: #{tpu_custom_call.1} parent=11 // pred_check
          %p375 = pneg %p196
        $region34: #{tpu_custom_call.1} parent=11 // pred_check_branch
          %377 = sbr.rel (%p375) target = $region36
        $region35: #{tpu_custom_call.1} parent=11 // pred_region
          %s379 = ssub.s32 512, 512
          %380 = vsyncadd [#allocation12], %s379
          %s381 = sshll.u32 [#allocation13], 4
          %s382 = int_to_ptr.vmem [resolvable:$true] %s381
          %387 = dma.hbm_to_vmem [thread:$0]  %s6, 512, %s382, [#allocation12], 64, 64, 4
        $region36: #{tpu_custom_call.1} parent=11 // pred_fallthru
          _
        // Predicated region
        $region37: #{tpu_custom_call.1} parent=11 // pred_check
          %p388 = pneg %p217
        $region38: #{tpu_custom_call.1} parent=11 // pred_check_branch
          %390 = sbr.rel (%p388) target = $region40
        $region39: #{tpu_custom_call.1} parent=11 // pred_region
          %s392 = ssub.s32 16, 16
          %393 = vsyncadd [#allocation15], %s392
          %s395 = sshll.u32 [#allocation14], 4
          %s396 = int_to_ptr.vmem [resolvable:$true] %s395
          %398 = dma.hbm_to_vmem [thread:$0]  %s7, 16, %s396, [#allocation15]
        $region40: #{tpu_custom_call.1} parent=11 // pred_fallthru
          _
      $region12: #{tpu_custom_call.1} parent=5 // pred_fallthru
        _
      %p399 = scmp.lt.s32.totalorder %s30, 4
      // Predicated region
      $region41: #{tpu_custom_call.1} parent=5 // pred_check
        %p400 = pneg %p399
      $region42: #{tpu_custom_call.1} parent=5 // pred_check_branch
        %402 = sbr.rel (%p400) target = $region44
      $region43: #{tpu_custom_call.1} parent=5 // pred_region
        // Predicated region
        $region45: #{tpu_custom_call.1} parent=43 // pred_check
          %p403 = pneg %p64
        $region46: #{tpu_custom_call.1} parent=43 // pred_check_branch
          %405 = sbr.rel (%p403) target = $region48
        $region47: #{tpu_custom_call.1} parent=43 // pred_region
          %s406 = sand.u32 %s54, 1
          %s407 = scalar_lea.sflag [#allocation3], %s406
          %s408 = sand.u32 %s54, 1
          %s409 = smul.addr %s408, 8
          %s410 = scalar_lea.vmem [#allocation2], %s409
          %s412 = ssub.s32 128, 128
          %413 = vsyncadd %s407, %s412
          %s414 = smul.addr %s37, 2
          %s415 = sadd.s32 %s38, %s414
          %s416 = smul.addr %s415, 128
          %s417 = scalar_lea.hbm %s0, %s416
          %s419 = sshll.u32 %s410, 4
          %s420 = int_to_ptr.vmem [resolvable:$true] %s419
          %422 = dma.hbm_to_vmem [thread:$0]  %s417, 128, %s420, %s407
        $region48: #{tpu_custom_call.1} parent=43 // pred_fallthru
          _
      $region44: #{tpu_custom_call.1} parent=5 // pred_fallthru
        _
      %p423 = scmp.le.s32.totalorder 1, %s30
      %p424 = scmp.lt.s32.totalorder %s30, 5
      %p425 = pnand %p423, %p424
      %p426 = pneg %p425
      // Predicated region
      $region49: #{tpu_custom_call.1} parent=5 // pred_check
        _
      $region50: #{tpu_custom_call.1} parent=5 // pred_check_branch
        %428 = sbr.rel (%p425) target = $region52
      $region51: #{tpu_custom_call.1} parent=5 // pred_region
        %s429 = ssub.s32 %s30, 1
        %s430 = sand.u32 %s57, 1
        %s431 = scalar_lea.sflag [#allocation3], %s430
        %s432 = sand.u32 %s57, 1
        %s433 = smul.addr %s432, 8
        %s434 = scalar_lea.vmem [#allocation2], %s433
        // Predicated region
        $region53: #{tpu_custom_call.1} parent=51 // pred_check
          %p435 = pneg %p70
        $region54: #{tpu_custom_call.1} parent=51 // pred_check_branch
          %437 = sbr.rel (%p435) target = $region56
        $region55: #{tpu_custom_call.1} parent=51 // pred_region
          %438 = dma.done %s431, 128
        $region56: #{tpu_custom_call.1} parent=51 // pred_fallthru
          _
        // Predicated region
        $region57: #{tpu_custom_call.1} parent=51 // pred_check
          %p439 = pneg %p91
        $region58: #{tpu_custom_call.1} parent=51 // pred_check_branch
          %441 = sbr.rel (%p439) target = $region60
        $region59: #{tpu_custom_call.1} parent=51 // pred_region
          %442 = dma.done [#allocation6], 16
        $region60: #{tpu_custom_call.1} parent=51 // pred_fallthru
          _
        // Predicated region
        $region61: #{tpu_custom_call.1} parent=51 // pred_check
          %p443 = pneg %p112
        $region62: #{tpu_custom_call.1} parent=51 // pred_check_branch
          %445 = sbr.rel (%p443) target = $region64
        $region63: #{tpu_custom_call.1} parent=51 // pred_region
          %446 = dma.done [#allocation6], 16
        $region64: #{tpu_custom_call.1} parent=51 // pred_fallthru
          _
        // Predicated region
        $region65: #{tpu_custom_call.1} parent=51 // pred_check
          %p447 = pneg %p133
        $region66: #{tpu_custom_call.1} parent=51 // pred_check_branch
          %449 = sbr.rel (%p447) target = $region68
        $region67: #{tpu_custom_call.1} parent=51 // pred_region
          %450 = dma.done [#allocation9], 512
        $region68: #{tpu_custom_call.1} parent=51 // pred_fallthru
          _
        // Predicated region
        $region69: #{tpu_custom_call.1} parent=51 // pred_check
          %p451 = pneg %p154
        $region70: #{tpu_custom_call.1} parent=51 // pred_check_branch
          %453 = sbr.rel (%p451) target = $region72
        $region71: #{tpu_custom_call.1} parent=51 // pred_region
          %454 = dma.done [#allocation9], 16
        $region72: #{tpu_custom_call.1} parent=51 // pred_fallthru
          _
        // Predicated region
        $region73: #{tpu_custom_call.1} parent=51 // pred_check
          %p455 = pneg %p175
        $region74: #{tpu_custom_call.1} parent=51 // pred_check_branch
          %457 = sbr.rel (%p455) target = $region76
        $region75: #{tpu_custom_call.1} parent=51 // pred_region
          %458 = dma.done [#allocation12], 512
        $region76: #{tpu_custom_call.1} parent=51 // pred_fallthru
          _
        // Predicated region
        $region77: #{tpu_custom_call.1} parent=51 // pred_check
          %p459 = pneg %p196
        $region78: #{tpu_custom_call.1} parent=51 // pred_check_branch
          %461 = sbr.rel (%p459) target = $region80
        $region79: #{tpu_custom_call.1} parent=51 // pred_region
          %462 = dma.done [#allocation12], 512
        $region80: #{tpu_custom_call.1} parent=51 // pred_fallthru
          _
        // Predicated region
        $region81: #{tpu_custom_call.1} parent=51 // pred_check
          %p463 = pneg %p217
        $region82: #{tpu_custom_call.1} parent=51 // pred_check_branch
          %465 = sbr.rel (%p463) target = $region84
        $region83: #{tpu_custom_call.1} parent=51 // pred_region
          %466 = dma.done [#allocation15], 16
        $region84: #{tpu_custom_call.1} parent=51 // pred_fallthru
          _
        %s467 = sand.u32 %s57, 1
        %s468 = scalar_lea.sflag [#allocation3], %s467
        %s469 = sand.u32 %s57, 1
        %s470 = smul.addr %s469, 8
        %s471 = scalar_lea.vmem [#allocation2], %s470
        %p472 = pneg %p70
        %p473 = pneg %p67
        %p474 = pneg %p91
        %p475 = pneg %p88
        %p476 = pneg %p112
        %p477 = pneg %p109
        %p478 = pneg %p133
        %p479 = pneg %p130
        %p480 = pneg %p154
        %p481 = pneg %p151
        %p482 = pneg %p175
        %p483 = pneg %p172
        %p484 = pneg %p196
        %p485 = pneg %p193
        %p486 = pneg %p217
        %p487 = pneg %p214
        %p488 = pneg %p245
        %p489 = pneg %p242
        %s490 = sand.u32 %s232, 1
        %s491 = scalar_lea.sflag [#allocation4], %s490
        %s492 = sand.u32 %s232, 1
        %s493 = smul.addr %s492, 16
        %s494 = scalar_lea.vmem [#allocation16], %s493
        %p495 = pneg %p273
        %p496 = pneg %p270
        %s497 = sand.u32 %s35, 1
        %s498 = scalar_lea.sflag [#allocation18], %s497
        %s499 = sand.u32 %s260, 1
        %s500 = smul.addr %s499, 16
        %s501 = scalar_lea.vmem [#allocation17], %s500
        %p502 = pneg %p301
        %p503 = pneg %p298
        %s504 = sand.u32 %s35, 1
        %s505 = scalar_lea.sflag [#allocation18], %s504
        %s506 = sand.u32 %s288, 1
        %s507 = smul.addr %s506, 16
        %s508 = scalar_lea.vmem [#allocation19], %s507
        %v510 = vld [vmem:[%s434] sm:$0xff]
        %v511 = vld [vmem:[#allocation5] sm:$0x1]
        %v512 = vld [vmem:[#allocation7] sm:$0x1]
        %vm513 = vcmask 523264
        %v514 = vsel %vm513, %v510, 0.0
        %515 = vadd.xlane.f32.xlu0 %v514
        %v516 = vpop.xlane.xlu0 %515
        %v517 = vrcp.pop 64.0
        %v518 = vmul.f32 %v516, %v517
        %v519 = vsub.f32 %v510, %v518
        %v520 = vmul.f32 %v519, %v519
        %v521 = vsel %vm513, %v520, 0.0
        %522 = vadd.xlane.f32.xlu0 %v521
        %v523 = vpop.xlane.xlu0 %522
        %v524 = vmul.f32 %v523, %v517
        %v525 = vadd.f32 %v524, 1e-05
        %v526 = vrsqrt.pop %v525
        %v527 = vmul.f32 %v519, %v526
        %v529 = vlaneseq
        %v530 = vshrl.u32 %v529, 7
        %v531 = vsub.s32 0, %v530
        %v532 = vrot.slane %v511, %v531
        %v534 = vmul.f32 %v527, %v532
        %v536 = vlaneseq
        %v537 = vshrl.u32 %v536, 7
        %v538 = vsub.s32 0, %v537
        %v539 = vrot.slane %v512, %v538
        %v541 = vadd.f32 %v534, %v539
        %v542 = vpack.c.bf16 %v541, %v541
        %v543 = vld [vmem:[#allocation8] sm:$0xf]
        %v544 = vld [vmem:[#allocation8 + $0x4] sm:$0xf]
        %v545 = vld [vmem:[#allocation8 + $0x8] sm:$0xf]
        %v546 = vld [vmem:[#allocation8 + $0xc] sm:$0xf]
        %v547 = vld [vmem:[#allocation8 + $0x10] sm:$0xf]
        %v548 = vld [vmem:[#allocation8 + $0x14] sm:$0xf]
        %v549 = vld [vmem:[#allocation8 + $0x18] sm:$0xf]
        %v550 = vld [vmem:[#allocation8 + $0x1c] sm:$0xf]
        %v551 = vld [vmem:[#allocation10] sm:$0x1]
        %v553 = vlaneseq
        %v554 = vshrl.u32 %v553, 7
        %v555 = vsub.s32 0, %v554
        %v556 = vrot.slane %v551, %v555
        %v566 = vunpack.c.l.b16 %v543
        %v567 = vunpack.c.l.b16 %v544
        %v568 = vunpack.c.l.b16 %v545
        %v569 = vunpack.c.l.b16 %v546
        %v570 = vunpack.c.l.b16 %v547
        %v571 = vunpack.c.l.b16 %v548
        %v572 = vunpack.c.l.b16 %v549
        %v573 = vunpack.c.l.b16 %v550
        %v574 = vpack.c.b16 %v567, %v566
        %v575 = vpack.c.b16 %v569, %v568
        %v576 = vpack.c.b16 %v571, %v570
        %v577 = vpack.c.b16 %v573, %v572
        %v583 = vsel %vm513, %v542, 0
        %585 = vmatprep.subr.bf16.mxu0 0
        %586 = vmatpush1.bf16.msra.mxu0 %v574
        %587 = vmatprep.subr.bf16.mxu0 0
        %588 = vmatpush1.bf16.msra.mxu0 %v575
        %589 = vmatprep.subr.bf16.mxu0 0
        %590 = vmatpush1.bf16.msra.mxu0 %v576
        %591 = vmatprep.subr.bf16.mxu0 0
        %592 = vmatpush1.bf16.msra.mxu0 %v577
        %593 = vmatprep.subr.bf16.mxu0 0
        %594 = vmatpush1.bf16.msra.mxu0 0
        %595 = vmatprep.subr.bf16.mxu0 0
        %596 = vmatpush1.bf16.msra.mxu0 0
        %597 = vmatprep.subr.bf16.mxu0 0
        %598 = vmatpush1.bf16.msra.mxu0 0
        %599 = vmatprep.subr.bf16.mxu0 0
        %600 = vmatpush1.bf16.msra.mxu0 0
        %601 = vmatprep.subr.bf16.mxu0 0
        %602 = vmatpush1.bf16.msra.mxu0 0
        %603 = vmatprep.subr.bf16.mxu0 0
        %604 = vmatpush1.bf16.msra.mxu0 0
        %605 = vmatprep.subr.bf16.mxu0 0
        %606 = vmatpush1.bf16.msra.mxu0 0
        %607 = vmatprep.subr.bf16.mxu0 0
        %608 = vmatpush1.bf16.msra.mxu0 0
        %609 = vmatprep.subr.bf16.mxu0 0
        %610 = vmatpush1.bf16.msra.mxu0 0
        %611 = vmatprep.subr.bf16.mxu0 0
        %612 = vmatpush1.bf16.msra.mxu0 0
        %613 = vmatprep.subr.bf16.mxu0 0
        %614 = vmatpush1.bf16.msra.mxu0 0
        %615 = vmatprep.subr.bf16.mxu0 0
        %616 = vmatpush1.bf16.msra.mxu0 0
        %617 = vmatprep.mubr.bf16.mxu0 0
        %618 = vmatmul.mubr.bf16.gmra.mrb[0].mxu0 %v583
        %v619 = vpop.f32.mrb[0].mxu0
        %v620 = vadd.f32 %v556, %v619
        %v621 = vpop.f32.mrb[0].mxu0
        %v622 = vpop.f32.mrb[0].mxu0
        %v623 = vpop.f32.mrb[0].mxu0
        %624 = vdwg.mxu0
        %v625 = vld [vmem:[#allocation11] sm:$0xf]
        %v626 = vld [vmem:[#allocation11 + $0x4] sm:$0xf]
        %v627 = vld [vmem:[#allocation11 + $0x8] sm:$0xf]
        %v628 = vld [vmem:[#allocation11 + $0xc] sm:$0xf]
        %v629 = vld [vmem:[#allocation11 + $0x10] sm:$0xf]
        %v630 = vld [vmem:[#allocation11 + $0x14] sm:$0xf]
        %v631 = vld [vmem:[#allocation11 + $0x18] sm:$0xf]
        %v632 = vld [vmem:[#allocation11 + $0x1c] sm:$0xf]
        %v641 = vunpack.c.l.b16 %v625
        %v642 = vunpack.c.l.b16 %v626
        %v643 = vunpack.c.l.b16 %v627
        %v644 = vunpack.c.l.b16 %v628
        %v645 = vunpack.c.l.b16 %v629
        %v646 = vunpack.c.l.b16 %v630
        %v647 = vunpack.c.l.b16 %v631
        %v648 = vunpack.c.l.b16 %v632
        %v649 = vpack.c.b16 %v642, %v641
        %v650 = vpack.c.b16 %v644, %v643
        %v651 = vpack.c.b16 %v646, %v645
        %v652 = vpack.c.b16 %v648, %v647
        %657 = vmatprep.subr.bf16.mxu0 0
        %658 = vmatpush1.bf16.msra.mxu0 %v649
        %659 = vmatprep.subr.bf16.mxu0 0
        %660 = vmatpush1.bf16.msra.mxu0 %v650
        %661 = vmatprep.subr.bf16.mxu0 0
        %662 = vmatpush1.bf16.msra.mxu0 %v651
        %663 = vmatprep.subr.bf16.mxu0 0
        %664 = vmatpush1.bf16.msra.mxu0 %v652
        %665 = vmatprep.subr.bf16.mxu0 0
        %666 = vmatpush1.bf16.msra.mxu0 0
        %667 = vmatprep.subr.bf16.mxu0 0
        %668 = vmatpush1.bf16.msra.mxu0 0
        %669 = vmatprep.subr.bf16.mxu0 0
        %670 = vmatpush1.bf16.msra.mxu0 0
        %671 = vmatprep.subr.bf16.mxu0 0
        %672 = vmatpush1.bf16.msra.mxu0 0
        %673 = vmatprep.subr.bf16.mxu0 0
        %674 = vmatpush1.bf16.msra.mxu0 0
        %675 = vmatprep.subr.bf16.mxu0 0
        %676 = vmatpush1.bf16.msra.mxu0 0
        %677 = vmatprep.subr.bf16.mxu0 0
        %678 = vmatpush1.bf16.msra.mxu0 0
        %679 = vmatprep.subr.bf16.mxu0 0
        %680 = vmatpush1.bf16.msra.mxu0 0
        %681 = vmatprep.subr.bf16.mxu0 0
        %682 = vmatpush1.bf16.msra.mxu0 0
        %683 = vmatprep.subr.bf16.mxu0 0
        %684 = vmatpush1.bf16.msra.mxu0 0
        %685 = vmatprep.subr.bf16.mxu0 0
        %686 = vmatpush1.bf16.msra.mxu0 0
        %687 = vmatprep.subr.bf16.mxu0 0
        %688 = vmatpush1.bf16.msra.mxu0 0
        %689 = vmatprep.mubr.bf16.mxu0 0
        %690 = vmatmul.mubr.bf16.gmra.mrb[0].mxu0 %v583
        %v691 = vpop.f32.mrb[0].mxu0
        %v692 = vadd.f32 0.0, %v691
        %v693 = vpop.f32.mrb[0].mxu0
        %v694 = vpop.f32.mrb[0].mxu0
        %v695 = vpop.f32.mrb[0].mxu0
        %696 = vdwg.mxu0
        %v697 = vld [vmem:[#allocation13] sm:$0xf]
        %v698 = vld [vmem:[#allocation13 + $0x4] sm:$0xf]
        %v699 = vld [vmem:[#allocation13 + $0x8] sm:$0xf]
        %v700 = vld [vmem:[#allocation13 + $0xc] sm:$0xf]
        %v701 = vld [vmem:[#allocation13 + $0x10] sm:$0xf]
        %v702 = vld [vmem:[#allocation13 + $0x14] sm:$0xf]
        %v703 = vld [vmem:[#allocation13 + $0x18] sm:$0xf]
        %v704 = vld [vmem:[#allocation13 + $0x1c] sm:$0xf]
        %v705 = vld [vmem:[#allocation14] sm:$0x1]
        %v707 = vlaneseq
        %v708 = vshrl.u32 %v707, 7
        %v709 = vsub.s32 0, %v708
        %v710 = vrot.slane %v705, %v709
        %v720 = vunpack.c.l.b16 %v697
        %v721 = vunpack.c.l.b16 %v698
        %v722 = vunpack.c.l.b16 %v699
        %v723 = vunpack.c.l.b16 %v700
        %v724 = vunpack.c.l.b16 %v701
        %v725 = vunpack.c.l.b16 %v702
        %v726 = vunpack.c.l.b16 %v703
        %v727 = vunpack.c.l.b16 %v704
        %v728 = vpack.c.b16 %v721, %v720
        %v729 = vpack.c.b16 %v723, %v722
        %v730 = vpack.c.b16 %v725, %v724
        %v731 = vpack.c.b16 %v727, %v726
        %736 = vmatprep.subr.bf16.mxu0 0
        %737 = vmatpush1.bf16.msra.mxu0 %v728
        %738 = vmatprep.subr.bf16.mxu0 0
        %739 = vmatpush1.bf16.msra.mxu0 %v729
        %740 = vmatprep.subr.bf16.mxu0 0
        %741 = vmatpush1.bf16.msra.mxu0 %v730
        %742 = vmatprep.subr.bf16.mxu0 0
        %743 = vmatpush1.bf16.msra.mxu0 %v731
        %744 = vmatprep.subr.bf16.mxu0 0
        %745 = vmatpush1.bf16.msra.mxu0 0
        %746 = vmatprep.subr.bf16.mxu0 0
        %747 = vmatpush1.bf16.msra.mxu0 0
        %748 = vmatprep.subr.bf16.mxu0 0
        %749 = vmatpush1.bf16.msra.mxu0 0
        %750 = vmatprep.subr.bf16.mxu0 0
        %751 = vmatpush1.bf16.msra.mxu0 0
        %752 = vmatprep.subr.bf16.mxu0 0
        %753 = vmatpush1.bf16.msra.mxu0 0
        %754 = vmatprep.subr.bf16.mxu0 0
        %755 = vmatpush1.bf16.msra.mxu0 0
        %756 = vmatprep.subr.bf16.mxu0 0
        %757 = vmatpush1.bf16.msra.mxu0 0
        %758 = vmatprep.subr.bf16.mxu0 0
        %759 = vmatpush1.bf16.msra.mxu0 0
        %760 = vmatprep.subr.bf16.mxu0 0
        %761 = vmatpush1.bf16.msra.mxu0 0
        %762 = vmatprep.subr.bf16.mxu0 0
        %763 = vmatpush1.bf16.msra.mxu0 0
        %764 = vmatprep.subr.bf16.mxu0 0
        %765 = vmatpush1.bf16.msra.mxu0 0
        %766 = vmatprep.subr.bf16.mxu0 0
        %767 = vmatpush1.bf16.msra.mxu0 0
        %768 = vmatprep.mubr.bf16.mxu0 0
        %769 = vmatmul.mubr.bf16.gmra.mrb[0].mxu0 %v583
        %v770 = vpop.f32.mrb[0].mxu0
        %v771 = vadd.f32 %v710, %v770
        %v772 = vpop.f32.mrb[0].mxu0
        %v773 = vpop.f32.mrb[0].mxu0
        %v774 = vpop.f32.mrb[0].mxu0
        %775 = vdwg.mxu0
        %777 = vrot.lane.b32.xlu0 %v620, 112
        %v778 = vpop.permute.xlu0 %777
        %780 = vrot.lane.b32.xlu0 %v620, 96
        %v781 = vpop.permute.xlu0 %780
        %783 = vrot.lane.b32.xlu0 %v620, 80
        %v784 = vpop.permute.xlu0 %783
        %v786 = vcombine.low %v620, %v781
        %v787 = vcombine.high %v620, %v781
        %v789 = vunpack.c.l.s4 1983009808
        %v790 = vunpack.c.0.s8 %v789
        %v791 = vlaneseq
        %v792 = vshrl.u32 %v791, 7
        %v793 = vsub.s32 %v790, %v792
        %v794 = vrot.slane %v786, %v793
        %v796 = vunpack.c.l.s4 1983009808
        %v797 = vunpack.c.0.s8 %v796
        %v798 = vlaneseq
        %v799 = vshrl.u32 %v798, 7
        %v800 = vsub.s32 %v797, %v799
        %v801 = vrot.slane %v787, %v800
        %v802 = vcombine.low %v778, %v784
        %v803 = vcombine.high %v778, %v784
        %v805 = vunpack.c.l.s4 1983009808
        %v806 = vunpack.c.0.s8 %v805
        %v807 = vlaneseq
        %v808 = vshrl.u32 %v807, 7
        %v809 = vsub.s32 %v806, %v808
        %v810 = vrot.slane %v802, %v809
        %v812 = vunpack.c.l.s4 1983009808
        %v813 = vunpack.c.0.s8 %v812
        %v814 = vlaneseq
        %v815 = vshrl.u32 %v814, 7
        %v816 = vsub.s32 %v813, %v815
        %v817 = vrot.slane %v803, %v816
        %v818 = vcombine.low %v794, %v810
        %v819 = vcombine.high %v794, %v810
        %v821 = vunpack.c.l.s4 1934713408
        %v822 = vunpack.c.0.s8 %v821
        %v823 = vlaneseq
        %v824 = vshrl.u32 %v823, 7
        %v825 = vsub.s32 %v822, %v824
        %v826 = vrot.slane %v818, %v825
        %v828 = vunpack.c.l.s4 1934713408
        %v829 = vunpack.c.0.s8 %v828
        %v830 = vlaneseq
        %v831 = vshrl.u32 %v830, 7
        %v832 = vsub.s32 %v829, %v831
        %v833 = vrot.slane %v819, %v832
        %v834 = vcombine.low %v801, %v817
        %v835 = vcombine.high %v801, %v817
        %v837 = vunpack.c.l.s4 1934713408
        %v838 = vunpack.c.0.s8 %v837
        %v839 = vlaneseq
        %v840 = vshrl.u32 %v839, 7
        %v841 = vsub.s32 %v838, %v840
        %v842 = vrot.slane %v834, %v841
        %v844 = vunpack.c.l.s4 1934713408
        %v845 = vunpack.c.0.s8 %v844
        %v846 = vlaneseq
        %v847 = vshrl.u32 %v846, 7
        %v848 = vsub.s32 %v845, %v847
        %v849 = vrot.slane %v835, %v848
        %v850 = vcombine.high %v826, 0.0
        %v851 = vcombine.high %v833, 0.0
        %v852 = vcombine.high %v842, 0.0
        %v853 = vcombine.high %v849, 0.0
        %v854 = vcombine.low %v826, %v833
        %v856 = vunpack.c.l.s4 1983009808
        %v857 = vunpack.c.0.s8 %v856
        %v858 = vlaneseq
        %v859 = vshrl.u32 %v858, 7
        %v860 = vsub.s32 %v857, %v859
        %v861 = vrot.slane %v854, %v860
        %v862 = vcombine.low %v850, %v851
        %v864 = vunpack.c.l.s4 1983009808
        %v865 = vunpack.c.0.s8 %v864
        %v866 = vlaneseq
        %v867 = vshrl.u32 %v866, 7
        %v868 = vsub.s32 %v865, %v867
        %v869 = vrot.slane %v862, %v868
        %v870 = vcombine.low %v842, %v849
        %v872 = vunpack.c.l.s4 1983009808
        %v873 = vunpack.c.0.s8 %v872
        %v874 = vlaneseq
        %v875 = vshrl.u32 %v874, 7
        %v876 = vsub.s32 %v873, %v875
        %v877 = vrot.slane %v870, %v876
        %v878 = vcombine.low %v852, %v853
        %v880 = vunpack.c.l.s4 1983009808
        %v881 = vunpack.c.0.s8 %v880
        %v882 = vlaneseq
        %v883 = vshrl.u32 %v882, 7
        %v884 = vsub.s32 %v881, %v883
        %v885 = vrot.slane %v878, %v884
        %v886 = vcombine.low %v861, %v869
        %v887 = vcombine.high %v861, %v869
        %v889 = vunpack.c.l.s4 1934713408
        %v890 = vunpack.c.0.s8 %v889
        %v891 = vlaneseq
        %v892 = vshrl.u32 %v891, 7
        %v893 = vsub.s32 %v890, %v892
        %v894 = vrot.slane %v886, %v893
        %v896 = vunpack.c.l.s4 1934713408
        %v897 = vunpack.c.0.s8 %v896
        %v898 = vlaneseq
        %v899 = vshrl.u32 %v898, 7
        %v900 = vsub.s32 %v897, %v899
        %v901 = vrot.slane %v887, %v900
        %v902 = vcombine.low %v877, %v885
        %v903 = vcombine.high %v877, %v885
        %v905 = vunpack.c.l.s4 1934713408
        %v906 = vunpack.c.0.s8 %v905
        %v907 = vlaneseq
        %v908 = vshrl.u32 %v907, 7
        %v909 = vsub.s32 %v906, %v908
        %v910 = vrot.slane %v902, %v909
        %v912 = vunpack.c.l.s4 1934713408
        %v913 = vunpack.c.0.s8 %v912
        %v914 = vlaneseq
        %v915 = vshrl.u32 %v914, 7
        %v916 = vsub.s32 %v913, %v915
        %v917 = vrot.slane %v903, %v916
        %v918 = vcombine.low %v894, %v910
        %v919 = vcombine.high %v894, %v910
        %v920 = vcombine.low %v901, %v917
        %v921 = vcombine.high %v901, %v917
        %v922 = vpack.c.bf16 %v918, %v918
        %v923 = vpack.c.bf16 %v919, %v919
        %v924 = vpack.c.bf16 %v920, %v920
        %v925 = vpack.c.bf16 %v921, %v921
        %vm926 = vcmask 125952
        %927 = vst.msk [vmem:[%s494] sm:$0xf] %vm926, %v922
        %928 = vst.msk [vmem:[%s494 + $0x4] sm:$0xf] %vm926, %v923
        %929 = vst.msk [vmem:[%s494 + $0x8] sm:$0xf] %vm926, %v924
        %930 = vst.msk [vmem:[%s494 + $0xc] sm:$0xf] %vm926, %v925
        %932 = vrot.lane.b32.xlu0 %v692, 112
        %v933 = vpop.permute.xlu0 %932
        %935 = vrot.lane.b32.xlu0 %v692, 96
        %v936 = vpop.permute.xlu0 %935
        %938 = vrot.lane.b32.xlu0 %v692, 80
        %v939 = vpop.permute.xlu0 %938
        %v941 = vcombine.low %v692, %v936
        %v942 = vcombine.high %v692, %v936
        %v944 = vunpack.c.l.s4 1983009808
        %v945 = vunpack.c.0.s8 %v944
        %v946 = vlaneseq
        %v947 = vshrl.u32 %v946, 7
        %v948 = vsub.s32 %v945, %v947
        %v949 = vrot.slane %v941, %v948
        %v951 = vunpack.c.l.s4 1983009808
        %v952 = vunpack.c.0.s8 %v951
        %v953 = vlaneseq
        %v954 = vshrl.u32 %v953, 7
        %v955 = vsub.s32 %v952, %v954
        %v956 = vrot.slane %v942, %v955
        %v957 = vcombine.low %v933, %v939
        %v958 = vcombine.high %v933, %v939
        %v960 = vunpack.c.l.s4 1983009808
        %v961 = vunpack.c.0.s8 %v960
        %v962 = vlaneseq
        %v963 = vshrl.u32 %v962, 7
        %v964 = vsub.s32 %v961, %v963
        %v965 = vrot.slane %v957, %v964
        %v967 = vunpack.c.l.s4 1983009808
        %v968 = vunpack.c.0.s8 %v967
        %v969 = vlaneseq
        %v970 = vshrl.u32 %v969, 7
        %v971 = vsub.s32 %v968, %v970
        %v972 = vrot.slane %v958, %v971
        %v973 = vcombine.low %v949, %v965
        %v974 = vcombine.high %v949, %v965
        %v976 = vunpack.c.l.s4 1934713408
        %v977 = vunpack.c.0.s8 %v976
        %v978 = vlaneseq
        %v979 = vshrl.u32 %v978, 7
        %v980 = vsub.s32 %v977, %v979
        %v981 = vrot.slane %v973, %v980
        %v983 = vunpack.c.l.s4 1934713408
        %v984 = vunpack.c.0.s8 %v983
        %v985 = vlaneseq
        %v986 = vshrl.u32 %v985, 7
        %v987 = vsub.s32 %v984, %v986
        %v988 = vrot.slane %v974, %v987
        %v989 = vcombine.low %v956, %v972
        %v990 = vcombine.high %v956, %v972
        %v992 = vunpack.c.l.s4 1934713408
        %v993 = vunpack.c.0.s8 %v992
        %v994 = vlaneseq
        %v995 = vshrl.u32 %v994, 7
        %v996 = vsub.s32 %v993, %v995
        %v997 = vrot.slane %v989, %v996
        %v999 = vunpack.c.l.s4 1934713408
        %v1000 = vunpack.c.0.s8 %v999
        %v1001 = vlaneseq
        %v1002 = vshrl.u32 %v1001, 7
        %v1003 = vsub.s32 %v1000, %v1002
        %v1004 = vrot.slane %v990, %v1003
        %v1005 = vcombine.high %v981, 0.0
        %v1006 = vcombine.high %v988, 0.0
        %v1007 = vcombine.high %v997, 0.0
        %v1008 = vcombine.high %v1004, 0.0
        %v1009 = vcombine.low %v981, %v988
        %v1011 = vunpack.c.l.s4 1983009808
        %v1012 = vunpack.c.0.s8 %v1011
        %v1013 = vlaneseq
        %v1014 = vshrl.u32 %v1013, 7
        %v1015 = vsub.s32 %v1012, %v1014
        %v1016 = vrot.slane %v1009, %v1015
        %v1017 = vcombine.low %v1005, %v1006
        %v1019 = vunpack.c.l.s4 1983009808
        %v1020 = vunpack.c.0.s8 %v1019
        %v1021 = vlaneseq
        %v1022 = vshrl.u32 %v1021, 7
        %v1023 = vsub.s32 %v1020, %v1022
        %v1024 = vrot.slane %v1017, %v1023
        %v1025 = vcombine.low %v997, %v1004
        %v1027 = vunpack.c.l.s4 1983009808
        %v1028 = vunpack.c.0.s8 %v1027
        %v1029 = vlaneseq
        %v1030 = vshrl.u32 %v1029, 7
        %v1031 = vsub.s32 %v1028, %v1030
        %v1032 = vrot.slane %v1025, %v1031
        %v1033 = vcombine.low %v1007, %v1008
        %v1035 = vunpack.c.l.s4 1983009808
        %v1036 = vunpack.c.0.s8 %v1035
        %v1037 = vlaneseq
        %v1038 = vshrl.u32 %v1037, 7
        %v1039 = vsub.s32 %v1036, %v1038
        %v1040 = vrot.slane %v1033, %v1039
        %v1041 = vcombine.low %v1016, %v1024
        %v1042 = vcombine.high %v1016, %v1024
        %v1044 = vunpack.c.l.s4 1934713408
        %v1045 = vunpack.c.0.s8 %v1044
        %v1046 = vlaneseq
        %v1047 = vshrl.u32 %v1046, 7
        %v1048 = vsub.s32 %v1045, %v1047
        %v1049 = vrot.slane %v1041, %v1048
        %v1051 = vunpack.c.l.s4 1934713408
        %v1052 = vunpack.c.0.s8 %v1051
        %v1053 = vlaneseq
        %v1054 = vshrl.u32 %v1053, 7
        %v1055 = vsub.s32 %v1052, %v1054
        %v1056 = vrot.slane %v1042, %v1055
        %v1057 = vcombine.low %v1032, %v1040
        %v1058 = vcombine.high %v1032, %v1040
        %v1060 = vunpack.c.l.s4 1934713408
        %v1061 = vunpack.c.0.s8 %v1060
        %v1062 = vlaneseq
        %v1063 = vshrl.u32 %v1062, 7
        %v1064 = vsub.s32 %v1061, %v1063
        %v1065 = vrot.slane %v1057, %v1064
        %v1067 = vunpack.c.l.s4 1934713408
        %v1068 = vunpack.c.0.s8 %v1067
        %v1069 = vlaneseq
        %v1070 = vshrl.u32 %v1069, 7
        %v1071 = vsub.s32 %v1068, %v1070
        %v1072 = vrot.slane %v1058, %v1071
        %v1073 = vcombine.low %v1049, %v1065
        %v1074 = vcombine.high %v1049, %v1065
        %v1075 = vcombine.low %v1056, %v1072
        %v1076 = vcombine.high %v1056, %v1072
        %v1077 = vpack.c.bf16 %v1073, %v1073
        %v1078 = vpack.c.bf16 %v1074, %v1074
        %v1079 = vpack.c.bf16 %v1075, %v1075
        %v1080 = vpack.c.bf16 %v1076, %v1076
        %1081 = vst.msk [vmem:[%s501] sm:$0xf] %vm926, %v1077
        %1082 = vst.msk [vmem:[%s501 + $0x4] sm:$0xf] %vm926, %v1078
        %1083 = vst.msk [vmem:[%s501 + $0x8] sm:$0xf] %vm926, %v1079
        %1084 = vst.msk [vmem:[%s501 + $0xc] sm:$0xf] %vm926, %v1080
        %1086 = vrot.lane.b32.xlu0 %v771, 112
        %v1087 = vpop.permute.xlu0 %1086
        %1089 = vrot.lane.b32.xlu0 %v771, 96
        %v1090 = vpop.permute.xlu0 %1089
        %1092 = vrot.lane.b32.xlu0 %v771, 80
        %v1093 = vpop.permute.xlu0 %1092
        %v1095 = vcombine.low %v771, %v1090
        %v1096 = vcombine.high %v771, %v1090
        %v1098 = vunpack.c.l.s4 1983009808
        %v1099 = vunpack.c.0.s8 %v1098
        %v1100 = vlaneseq
        %v1101 = vshrl.u32 %v1100, 7
        %v1102 = vsub.s32 %v1099, %v1101
        %v1103 = vrot.slane %v1095, %v1102
        %v1105 = vunpack.c.l.s4 1983009808
        %v1106 = vunpack.c.0.s8 %v1105
        %v1107 = vlaneseq
        %v1108 = vshrl.u32 %v1107, 7
        %v1109 = vsub.s32 %v1106, %v1108
        %v1110 = vrot.slane %v1096, %v1109
        %v1111 = vcombine.low %v1087, %v1093
        %v1112 = vcombine.high %v1087, %v1093
        %v1114 = vunpack.c.l.s4 1983009808
        %v1115 = vunpack.c.0.s8 %v1114
        %v1116 = vlaneseq
        %v1117 = vshrl.u32 %v1116, 7
        %v1118 = vsub.s32 %v1115, %v1117
        %v1119 = vrot.slane %v1111, %v1118
        %v1121 = vunpack.c.l.s4 1983009808
        %v1122 = vunpack.c.0.s8 %v1121
        %v1123 = vlaneseq
        %v1124 = vshrl.u32 %v1123, 7
        %v1125 = vsub.s32 %v1122, %v1124
        %v1126 = vrot.slane %v1112, %v1125
        %v1127 = vcombine.low %v1103, %v1119
        %v1128 = vcombine.high %v1103, %v1119
        %v1130 = vunpack.c.l.s4 1934713408
        %v1131 = vunpack.c.0.s8 %v1130
        %v1132 = vlaneseq
        %v1133 = vshrl.u32 %v1132, 7
        %v1134 = vsub.s32 %v1131, %v1133
        %v1135 = vrot.slane %v1127, %v1134
        %v1137 = vunpack.c.l.s4 1934713408
        %v1138 = vunpack.c.0.s8 %v1137
        %v1139 = vlaneseq
        %v1140 = vshrl.u32 %v1139, 7
        %v1141 = vsub.s32 %v1138, %v1140
        %v1142 = vrot.slane %v1128, %v1141
        %v1143 = vcombine.low %v1110, %v1126
        %v1144 = vcombine.high %v1110, %v1126
        %v1146 = vunpack.c.l.s4 1934713408
        %v1147 = vunpack.c.0.s8 %v1146
        %v1148 = vlaneseq
        %v1149 = vshrl.u32 %v1148, 7
        %v1150 = vsub.s32 %v1147, %v1149
        %v1151 = vrot.slane %v1143, %v1150
        %v1153 = vunpack.c.l.s4 1934713408
        %v1154 = vunpack.c.0.s8 %v1153
        %v1155 = vlaneseq
        %v1156 = vshrl.u32 %v1155, 7
        %v1157 = vsub.s32 %v1154, %v1156
        %v1158 = vrot.slane %v1144, %v1157
        %v1159 = vcombine.high %v1135, 0.0
        %v1160 = vcombine.high %v1142, 0.0
        %v1161 = vcombine.high %v1151, 0.0
        %v1162 = vcombine.high %v1158, 0.0
        %v1163 = vcombine.low %v1135, %v1142
        %v1165 = vunpack.c.l.s4 1983009808
        %v1166 = vunpack.c.0.s8 %v1165
        %v1167 = vlaneseq
        %v1168 = vshrl.u32 %v1167, 7
        %v1169 = vsub.s32 %v1166, %v1168
        %v1170 = vrot.slane %v1163, %v1169
        %v1171 = vcombine.low %v1159, %v1160
        %v1173 = vunpack.c.l.s4 1983009808
        %v1174 = vunpack.c.0.s8 %v1173
        %v1175 = vlaneseq
        %v1176 = vshrl.u32 %v1175, 7
        %v1177 = vsub.s32 %v1174, %v1176
        %v1178 = vrot.slane %v1171, %v1177
        %v1179 = vcombine.low %v1151, %v1158
        %v1181 = vunpack.c.l.s4 1983009808
        %v1182 = vunpack.c.0.s8 %v1181
        %v1183 = vlaneseq
        %v1184 = vshrl.u32 %v1183, 7
        %v1185 = vsub.s32 %v1182, %v1184
        %v1186 = vrot.slane %v1179, %v1185
        %v1187 = vcombine.low %v1161, %v1162
        %v1189 = vunpack.c.l.s4 1983009808
        %v1190 = vunpack.c.0.s8 %v1189
        %v1191 = vlaneseq
        %v1192 = vshrl.u32 %v1191, 7
        %v1193 = vsub.s32 %v1190, %v1192
        %v1194 = vrot.slane %v1187, %v1193
        %v1195 = vcombine.low %v1170, %v1178
        %v1196 = vcombine.high %v1170, %v1178
        %v1198 = vunpack.c.l.s4 1934713408
        %v1199 = vunpack.c.0.s8 %v1198
        %v1200 = vlaneseq
        %v1201 = vshrl.u32 %v1200, 7
        %v1202 = vsub.s32 %v1199, %v1201
        %v1203 = vrot.slane %v1195, %v1202
        %v1205 = vunpack.c.l.s4 1934713408
        %v1206 = vunpack.c.0.s8 %v1205
        %v1207 = vlaneseq
        %v1208 = vshrl.u32 %v1207, 7
        %v1209 = vsub.s32 %v1206, %v1208
        %v1210 = vrot.slane %v1196, %v1209
        %v1211 = vcombine.low %v1186, %v1194
        %v1212 = vcombine.high %v1186, %v1194
        %v1214 = vunpack.c.l.s4 1934713408
        %v1215 = vunpack.c.0.s8 %v1214
        %v1216 = vlaneseq
        %v1217 = vshrl.u32 %v1216, 7
        %v1218 = vsub.s32 %v1215, %v1217
        %v1219 = vrot.slane %v1211, %v1218
        %v1221 = vunpack.c.l.s4 1934713408
        %v1222 = vunpack.c.0.s8 %v1221
        %v1223 = vlaneseq
        %v1224 = vshrl.u32 %v1223, 7
        %v1225 = vsub.s32 %v1222, %v1224
        %v1226 = vrot.slane %v1212, %v1225
        %v1227 = vcombine.low %v1203, %v1219
        %v1228 = vcombine.high %v1203, %v1219
        %v1229 = vcombine.low %v1210, %v1226
        %v1230 = vcombine.high %v1210, %v1226
        %v1231 = vpack.c.bf16 %v1227, %v1227
        %v1232 = vpack.c.bf16 %v1228, %v1228
        %v1233 = vpack.c.bf16 %v1229, %v1229
        %v1234 = vpack.c.bf16 %v1230, %v1230
        %1235 = vst.msk [vmem:[%s508] sm:$0xf] %vm926, %v1231
        %1236 = vst.msk [vmem:[%s508 + $0x4] sm:$0xf] %vm926, %v1232
        %1237 = vst.msk [vmem:[%s508 + $0x8] sm:$0xf] %vm926, %v1233
        %1238 = vst.msk [vmem:[%s508 + $0xc] sm:$0xf] %vm926, %v1234
        %s1239 = sand.u32 %s232, 1
        %s1240 = scalar_lea.sflag [#allocation4], %s1239
        %s1241 = sand.u32 %s232, 1
        %s1242 = smul.addr %s1241, 16
        %s1243 = scalar_lea.vmem [#allocation16], %s1242
        %s1244 = sand.u32 %s35, 1
        %s1245 = scalar_lea.sflag [#allocation18], %s1244
        %s1246 = sand.u32 %s260, 1
        %s1247 = smul.addr %s1246, 16
        %s1248 = scalar_lea.vmem [#allocation17], %s1247
        %s1249 = sand.u32 %s35, 1
        %s1250 = scalar_lea.sflag [#allocation18], %s1249
        %s1251 = sand.u32 %s288, 1
        %s1252 = smul.addr %s1251, 16
        %s1253 = scalar_lea.vmem [#allocation19], %s1252
        // Predicated region
        $region85: #{tpu_custom_call.1} parent=51 // pred_check
          %p1254 = pneg %p242
        $region86: #{tpu_custom_call.1} parent=51 // pred_check_branch
          %1256 = sbr.rel (%p1254) target = $region88
        $region87: #{tpu_custom_call.1} parent=51 // pred_region
          %s1258 = ssub.s32 256, 256
          %1259 = vsyncadd %s1240, %s1258
          %s1260 = smul.addr %s39, 8
          %s1261 = sadd.s32 %s40, %s1260
          %s1262 = smul.addr %s1261, 64
          %s1263 = scalar_lea.hbm %s8, %s1262
          %s1264 = sshll.u32 %s1243, 4
          %s1265 = int_to_ptr.vmem [resolvable:$true] %s1264
          %1270 = dma.vmem_to_hbm [thread:$0]  %s1265, 256, %s1263, %s1240, 64, 128, 4
        $region88: #{tpu_custom_call.1} parent=51 // pred_fallthru
          _
        // Predicated region
        $region89: #{tpu_custom_call.1} parent=51 // pred_check
          %p1271 = pneg %p270
        $region90: #{tpu_custom_call.1} parent=51 // pred_check_branch
          %1273 = sbr.rel (%p1271) target = $region92
        $region91: #{tpu_custom_call.1} parent=51 // pred_region
          %s1275 = ssub.s32 256, 256
          %1276 = vsyncadd %s1245, %s1275
          %s1277 = smul.addr %s39, 8
          %s1278 = sadd.s32 %s40, %s1277
          %s1279 = smul.addr %s1278, 64
          %s1280 = scalar_lea.hbm %s9, %s1279
          %s1281 = sshll.u32 %s1248, 4
          %s1282 = int_to_ptr.vmem [resolvable:$true] %s1281
          %1287 = dma.vmem_to_hbm [thread:$0]  %s1282, 256, %s1280, %s1245, 64, 128, 4
        $region92: #{tpu_custom_call.1} parent=51 // pred_fallthru
          _
        // Predicated region
        $region93: #{tpu_custom_call.1} parent=51 // pred_check
          %p1288 = pneg %p298
        $region94: #{tpu_custom_call.1} parent=51 // pred_check_branch
          %1290 = sbr.rel (%p1288) target = $region96
        $region95: #{tpu_custom_call.1} parent=51 // pred_region
          %s1292 = ssub.s32 256, 256
          %1293 = vsyncadd %s1250, %s1292
          %s1294 = smul.addr %s39, 8
          %s1295 = sadd.s32 %s40, %s1294
          %s1296 = smul.addr %s1295, 64
          %s1297 = scalar_lea.hbm %s10, %s1296
          %s1298 = sshll.u32 %s1253, 4
          %s1299 = int_to_ptr.vmem [resolvable:$true] %s1298
          %1304 = dma.vmem_to_hbm [thread:$0]  %s1299, 256, %s1297, %s1250, 64, 128, 4
        $region96: #{tpu_custom_call.1} parent=51 // pred_fallthru
          _
      $region52: #{tpu_custom_call.1} parent=5 // pred_fallthru
        _
      %p1305 = scmp.le.s32.totalorder 2, %s30
      // Predicated region
      $region97: #{tpu_custom_call.1} parent=5 // pred_check
        %p1306 = pneg %p1305
      $region98: #{tpu_custom_call.1} parent=5 // pred_check_branch
        %1308 = sbr.rel (%p1306) target = $region100
      $region99: #{tpu_custom_call.1} parent=5 // pred_region
        %s1309 = ssub.s32 %s30, 2
        // Predicated region
        $region101: #{tpu_custom_call.1} parent=99 // pred_check
          %p1310 = pneg %p248
        $region102: #{tpu_custom_call.1} parent=99 // pred_check_branch
          %1312 = sbr.rel (%p1310) target = $region104
        $region103: #{tpu_custom_call.1} parent=99 // pred_region
          %s1313 = sand.u32 %s233, 1
          %s1314 = scalar_lea.sflag [#allocation4], %s1313
          %s1315 = sand.u32 %s233, 1
          %s1316 = smul.addr %s1315, 16
          %s1317 = scalar_lea.vmem [#allocation16], %s1316
          %1318 = dma.done %s1314, 256
        $region104: #{tpu_custom_call.1} parent=99 // pred_fallthru
          _
        // Predicated region
        $region105: #{tpu_custom_call.1} parent=99 // pred_check
          %p1319 = pneg %p276
        $region106: #{tpu_custom_call.1} parent=99 // pred_check_branch
          %1321 = sbr.rel (%p1319) target = $region108
        $region107: #{tpu_custom_call.1} parent=99 // pred_region
          %s1322 = sand.u32 %s36, 1
          %s1323 = scalar_lea.sflag [#allocation18], %s1322
          %s1324 = sand.u32 %s261, 1
          %s1325 = smul.addr %s1324, 16
          %s1326 = scalar_lea.vmem [#allocation17], %s1325
          %1327 = dma.done %s1323, 256
        $region108: #{tpu_custom_call.1} parent=99 // pred_fallthru
          _
        // Predicated region
        $region109: #{tpu_custom_call.1} parent=99 // pred_check
          %p1328 = pneg %p304
        $region110: #{tpu_custom_call.1} parent=99 // pred_check_branch
          %1330 = sbr.rel (%p1328) target = $region112
        $region111: #{tpu_custom_call.1} parent=99 // pred_region
          %s1331 = sand.u32 %s36, 1
          %s1332 = scalar_lea.sflag [#allocation18], %s1331
          %s1333 = sand.u32 %s289, 1
          %s1334 = smul.addr %s1333, 16
          %s1335 = scalar_lea.vmem [#allocation19], %s1334
          %1336 = dma.done %s1332, 256
        $region112: #{tpu_custom_call.1} parent=99 // pred_fallthru
          _
      $region100: #{tpu_custom_call.1} parent=5 // pred_fallthru
        _
    $region6: #{tpu_custom_call.1} parent=1 // loop_footer
      %s34 = sadd.s32 1, %s30
    $region7: #{tpu_custom_call.1} parent=1 // loop_footer_branch
      %29 = sbr.rel target = $region3
    $region8: #{tpu_custom_call.1} parent=1 // loop_exit
      _
    %1337 = vsyncpa [#allocation3], 1
    %s1338 = scalar_lea.sflag [#allocation3], 1
    %1339 = vsyncpa %s1338, 1
    %1340 = vsyncpa [#allocation6], 1
    %1341 = vsyncpa [#allocation9], 1
    %1342 = vsyncpa [#allocation12], 1
    %1343 = vsyncpa [#allocation15], 1
    %1344 = vsyncpa [#allocation4], 1
    %s1345 = scalar_lea.sflag [#allocation4], 1
    %1346 = vsyncpa %s1345, 1
    %1347 = vsyncpa [#allocation18], 1
    %s1348 = scalar_lea.sflag [#allocation18], 1
    %1349 = vsyncpa %s1348, 1

</llo_original>
